<compile_context>
chip_gen: v7x
topology: tpu7x:2x2x1
jax: 0.10.0
libtpu: 0.0.40
codegen_flags: <defaults>
</compile_context>

<pallas_src>
import math
import functools

import jax
import jax.numpy as jnp
from jax.experimental import pallas as pl
from jax.experimental.pallas import tpu as pltpu


# Above the default scoped limits (16 MiB v5e / 32 MiB v6e,v7x), comfortably
# below v7x's 64 MiB physical VMEM. Demo working sets are < 1 MiB anyway.
_VMEM_LIMIT = 48 * 1024 * 1024

# Matmul operand dtype. jnp.bfloat16 => ~3x MXU throughput + half weight DMA
# bytes (accumulation stays f32); jnp.float32 => bit-faithful to the PyTorch
# reference. Keep f32 for semantic fidelity in this script.
_MATMUL_DTYPE = jnp.float32


def _pick_group(batch, seq, target_rows):
    """Batch elements per grid step.

    Keeps the row tile sublane (8-row) aligned and, whenever the batch can be
    split, ensures >= 2 grid steps so v7x's two TensorCores both get work
    (dimension_semantics=("parallel",) shards grid steps across cores).
    """
    g = max(1, min(batch, max(1, target_rows // max(seq, 1))))
    if batch > 1 and pl.cdiv(batch, g) < 2:
        g = max(1, (batch + 1) // 2)
    while g > 1 and (g * seq) % 8 != 0:
        g -= 1
    if (g * seq) % 8 != 0 and g != batch:
        g = batch  # full-array block is always layout-legal
    return g


def _mm(a, b):
    """MXU matmul with optional bf16 operand cast, f32 accumulation."""
    return jnp.dot(a.astype(_MATMUL_DTYPE), b.astype(_MATMUL_DTYPE),
                   preferred_element_type=jnp.float32)


# ---------------------------------------------------------------------------
# Kernel 1: embedding linear + eval-mode BatchNorm1d affine + positional enc.
# ---------------------------------------------------------------------------

def _embed_kernel(x_ref, w_ref, b_ref, sc_ref, sh_ref, pe_ref, o_ref, *, group):
    y = _mm(x_ref[...], w_ref[...]) + b_ref[...]
    y = y * sc_ref[...] + sh_ref[...]            # BN1 (eval) folded affine
    pe = pe_ref[...]                             # (S, D) — single copy in VMEM
    if group > 1:
        pe = jnp.concatenate([pe] * group, axis=0)   # (TM, D), built in VMEM only
    o_ref[...] = (y + pe).astype(o_ref.dtype)


def embed_bn_pe(x2d, w, b, scale, shift, pe, seq_len):
    """x2d: (B*S, F) -> (B*S, D); fuses embedding, BN1 affine, PE add."""
    M, F = x2d.shape
    D = w.shape[1]
    S = seq_len
    ge = _pick_group(M // S, S, 512)
    TM = ge * S
    grid = (pl.cdiv(M, TM),)
    return pl.pallas_call(
        functools.partial(_embed_kernel, group=ge),
        out_shape=jax.ShapeDtypeStruct((M, D), jnp.float32),
        grid=grid,
        in_specs=[
            pl.BlockSpec((TM, F), lambda i: (i, 0)),
            pl.BlockSpec((F, D), lambda i: (0, 0)),
            pl.BlockSpec((1, D), lambda i: (0, 0)),
            pl.BlockSpec((1, D), lambda i: (0, 0)),
            pl.BlockSpec((1, D), lambda i: (0, 0)),
            pl.BlockSpec((S, D), lambda i: (0, 0)),
        ],
        out_specs=pl.BlockSpec((TM, D), lambda i: (i, 0)),
        compiler_params=pltpu.CompilerParams(
            dimension_semantics=("parallel",), vmem_limit_bytes=_VMEM_LIMIT),
        cost_estimate=pl.CostEstimate(
            flops=2 * M * F * D, transcendentals=0,
            bytes_accessed=4 * (M * F + F * D + 2 * M * D + S * D)),
    )(x2d, w, b, scale, shift, pe)


# ---------------------------------------------------------------------------
# Kernel 2: fused transformer encoder layer
#   QKV proj + MHA + out proj + residual + LN1 + FFN + residual + LN2
# ---------------------------------------------------------------------------

def _encoder_layer_kernel(h_ref, w_in_ref, b_in_ref, w_out_ref, b_out_ref,
                          ln1_g_ref, ln1_b_ref,
                          w_ff1_ref, b_ff1_ref, w_ff2_ref, b_ff2_ref,
                          ln2_g_ref, ln2_b_ref, o_ref,
                          *, nhead, seq_len, group, d_model, scale, eps):
    S, H, D = seq_len, nhead, d_model
    Dh = D // H
    x = h_ref[...]                                           # (TM, D), TM = group*S

    # ---- fused QKV projection: one MXU-filling (TM, D) @ (D, 3D) matmul ----
    qkv = _mm(x, w_in_ref[...]) + b_in_ref[...]              # (TM, 3D)

    # ---- per-(batch element, head) softmax attention on the VMEM qkv tile ----
    # Only the small (S, S) score/softmax/attn·V work stays per (group, head);
    # all projections are hoisted to full-tile matmuls above/below.
    # (group and nhead are small static ints; for large counts convert these
    #  unrolled loops to lax.fori_loop(..., unroll=True) to bound live ranges.)
    ctx_rows = []
    for g in range(group):
        r0 = g * S
        heads = []
        for hd in range(H):
            c0 = hd * Dh
            q = qkv[r0:r0 + S, c0:c0 + Dh]                   # (S, Dh)
            k = qkv[r0:r0 + S, D + c0:D + c0 + Dh]
            v = qkv[r0:r0 + S, 2 * D + c0:2 * D + c0 + Dh]
            s = jax.lax.dot_general(                         # q @ k^T, (S, S)
                q.astype(_MATMUL_DTYPE), k.astype(_MATMUL_DTYPE),
                (((1,), (1,)), ((), ())),
                preferred_element_type=jnp.float32) * scale
            m = jnp.max(s, axis=-1, keepdims=True)
            p = jnp.exp(s - m)
            attn = p / jnp.sum(p, axis=-1, keepdims=True)    # exact softmax
            heads.append(_mm(attn, v))                       # (S, Dh)
        ctx_rows.append(jnp.concatenate(heads, axis=-1))     # (S, D) concat layout
    ctx = ctx_rows[0] if group == 1 else jnp.concatenate(ctx_rows, axis=0)

    # ---- single (TM, D) @ (D, D) output projection + residual + LayerNorm1 ----
    y = x + _mm(ctx, w_out_ref[...]) + b_out_ref[...]
    mean = jnp.mean(y, axis=-1, keepdims=True)
    var = jnp.mean((y - mean) ** 2, axis=-1, keepdims=True)
    y = (y - mean) * jax.lax.rsqrt(var + eps) * ln1_g_ref[...] + ln1_b_ref[...]

    # ---- feed-forward (linear -> ReLU -> linear) + residual + LayerNorm2 ----
    ff = jnp.maximum(_mm(y, w_ff1_ref[...]) + b_ff1_ref[...], 0.0)
    ff = _mm(ff, w_ff2_ref[...]) + b_ff2_ref[...]
    z = y + ff
    mean = jnp.mean(z, axis=-1, keepdims=True)
    var = jnp.mean((z - mean) ** 2, axis=-1, keepdims=True)
    o_ref[...] = ((z - mean) * jax.lax.rsqrt(var + eps) * ln2_g_ref[...]
                  + ln2_b_ref[...]).astype(o_ref.dtype)


def encoder_layer(h, lp, batch, seq_len, nhead, eps=1e-5):
    M, D = h.shape
    Fff = lp["w_ff1"].shape[1]
    Dh = D // nhead
    ga = _pick_group(batch, seq_len, 256)
    TM = ga * seq_len
    grid = (pl.cdiv(batch, ga),)

    kern = functools.partial(
        _encoder_layer_kernel, nhead=nhead, seq_len=seq_len, group=ga,
        d_model=D, scale=1.0 / math.sqrt(Dh), eps=eps)

    flops = (2 * M * D * 3 * D            # QKV projection
             + 4 * batch * nhead * seq_len * seq_len * Dh   # scores + attn@V
             + 2 * M * D * D              # output projection
             + 4 * M * D * Fff)           # FFN
    bytes_accessed = 4 * (2 * M * D + 3 * D * D + D * D + 2 * D * Fff + 8 * D + Fff)

    # TODO(synk): on v7x, single-buffer the constant-index weight blocks
    # (pipeline_mode=pl.Buffered(1)) to halve weight VMEM at production sizes.
    return pl.pallas_call(
        kern,
        out_shape=jax.ShapeDtypeStruct((M, D), jnp.float32),
        grid=grid,
        in_specs=[
            pl.BlockSpec((TM, D), lambda i: (i, 0)),
            pl.BlockSpec((D, 3 * D), lambda i: (0, 0)),
            pl.BlockSpec((1, 3 * D), lambda i: (0, 0)),
            pl.BlockSpec((D, D), lambda i: (0, 0)),
            pl.BlockSpec((1, D), lambda i: (0, 0)),
            pl.BlockSpec((1, D), lambda i: (0, 0)),
            pl.BlockSpec((1, D), lambda i: (0, 0)),
            pl.BlockSpec((D, Fff), lambda i: (0, 0)),
            pl.BlockSpec((1, Fff), lambda i: (0, 0)),
            pl.BlockSpec((Fff, D), lambda i: (0, 0)),
            pl.BlockSpec((1, D), lambda i: (0, 0)),
            pl.BlockSpec((1, D), lambda i: (0, 0)),
            pl.BlockSpec((1, D), lambda i: (0, 0)),
        ],
        out_specs=pl.BlockSpec((TM, D), lambda i: (i, 0)),
        compiler_params=pltpu.CompilerParams(
            dimension_semantics=("parallel",), vmem_limit_bytes=_VMEM_LIMIT),
        cost_estimate=pl.CostEstimate(
            flops=flops,
            transcendentals=batch * nhead * seq_len * seq_len,
            bytes_accessed=bytes_accessed),
    )(h, lp["w_in"], lp["b_in"], lp["w_out"], lp["b_out"],
      lp["ln1_g"], lp["ln1_b"], lp["w_ff1"], lp["b_ff1"],
      lp["w_ff2"], lp["b_ff2"], lp["ln2_g"], lp["ln2_b"])


# ---------------------------------------------------------------------------
# Kernel 3: decoder head (linear + BN2 affine + ReLU + (d_half -> 1) reduce)
# ---------------------------------------------------------------------------

def _decoder_kernel(x_ref, w1_ref, b1_ref, sc_ref, sh_ref, w2t_ref, b2_ref, o_ref):
    d = _mm(x_ref[...], w1_ref[...]) + b1_ref[...]
    d = d * sc_ref[...] + sh_ref[...]            # BN2 (eval) folded affine
    d = jnp.maximum(d, 0.0)
    # final (d_half -> 1) linear as an in-kernel lane reduction (no N=1 matmul)
    o_ref[...] = jnp.sum(d * w2t_ref[...], axis=-1, keepdims=True) + b2_ref[...]


def decoder_head(x, w1, b1, scale, shift, w2, b2):
    B, D = x.shape
    Dh2 = w1.shape[1]
    TB = B if B <= 256 else 256
    grid = (pl.cdiv(B, TB),)
    w2t = w2.reshape(1, Dh2)                     # (d_half, 1) -> (1, d_half)
    return pl.pallas_call(
        _decoder_kernel,
        out_shape=jax.ShapeDtypeStruct((B, 1), jnp.float32),
        grid=grid,
        in_specs=[
            pl.BlockSpec((TB, D), lambda i: (i, 0)),
            pl.BlockSpec((D, Dh2), lambda i: (0, 0)),
            pl.BlockSpec((1, Dh2), lambda i: (0, 0)),
            pl.BlockSpec((1, Dh2), lambda i: (0, 0)),
            pl.BlockSpec((1, Dh2), lambda i: (0, 0)),
            pl.BlockSpec((1, Dh2), lambda i: (0, 0)),
            pl.BlockSpec((1, 1), lambda i: (0, 0)),
        ],
        out_specs=pl.BlockSpec((TB, 1), lambda i: (i, 0)),
        compiler_params=pltpu.CompilerParams(
            dimension_semantics=("parallel",), vmem_limit_bytes=_VMEM_LIMIT),
        cost_estimate=pl.CostEstimate(
            flops=2 * B * D * Dh2 + 2 * B * Dh2, transcendentals=0,
            bytes_accessed=4 * (B * D + D * Dh2 + B + 5 * Dh2)),
    )(x, w1, b1, scale, shift, w2t, b2)


# ---------------------------------------------------------------------------
# Model glue (parameter setup, forward)
# ---------------------------------------------------------------------------

def positional_encoding(seq_len, d_model):
    position = jnp.arange(seq_len, dtype=jnp.float32)[:, None]
    div_term = jnp.exp(
        jnp.arange(0, d_model, 2, dtype=jnp.float32) * (-math.log(10000.0) / d_model))
    pe = jnp.zeros((seq_len, d_model), jnp.float32)
    pe = pe.at[:, 0::2].set(jnp.sin(position * div_term))
    pe = pe.at[:, 1::2].set(jnp.cos(position * div_term))
    return pe


def init_params(key, input_dim, d_model, nhead, num_layers, dim_ff):
    # NOTE: weights stored (in_features, out_features); porting a real torch
    # state_dict requires transposing every nn.Linear / in_proj / out_proj weight.
    def xavier(k, shape, fan_in, fan_out):
        limit = math.sqrt(6.0 / (fan_in + fan_out))
        return jax.random.uniform(k, shape, jnp.float32, -limit, limit)

    keys = iter(jax.random.split(key, 8 + 4 * num_layers))
    p = {}
    p["emb_w"] = xavier(next(keys), (input_dim, d_model), input_dim, d_model)
    p["emb_b"] = jnp.zeros((1, d_model), jnp.float32)

    # BatchNorm1d(d_model) — eval-mode running stats.
    p["bn1_gamma"] = jnp.ones((1, d_model), jnp.float32)
    p["bn1_beta"] = jnp.zeros((1, d_model), jnp.float32)
    p["bn1_mean"] = jnp.zeros((1, d_model), jnp.float32)
    p["bn1_var"] = jnp.ones((1, d_model), jnp.float32)

    layers = []
    for _ in range(num_layers):
        lp = {}
        # packed in_proj, column order [q | k | v], each split per-head by Dh columns
        lp["w_in"] = xavier(next(keys), (d_model, 3 * d_model), d_model, 3 * d_model)
        lp["b_in"] = jnp.zeros((1, 3 * d_model), jnp.float32)
        lp["w_out"] = xavier(next(keys), (d_model, d_model), d_model, d_model)
        lp["b_out"] = jnp.zeros((1, d_model), jnp.float32)
        lp["ln1_g"] = jnp.ones((1, d_model), jnp.float32)
        lp["ln1_b"] = jnp.zeros((1, d_model), jnp.float32)
        lp["w_ff1"] = xavier(next(keys), (d_model, dim_ff), d_model, dim_ff)
        lp["b_ff1"] = jnp.zeros((1, dim_ff), jnp.float32)
        lp["w_ff2"] = xavier(next(keys), (dim_ff, d_model), dim_ff, d_model)
        lp["b_ff2"] = jnp.zeros((1, d_model), jnp.float32)
        lp["ln2_g"] = jnp.ones((1, d_model), jnp.float32)
        lp["ln2_b"] = jnp.zeros((1, d_model), jnp.float32)
        layers.append(lp)
    p["layers"] = layers

    d_half = d_model // 2
    p["dec_w1"] = xavier(next(keys), (d_model, d_half), d_model, d_half)
    p["dec_b1"] = jnp.zeros((1, d_half), jnp.float32)
    p["bn2_gamma"] = jnp.ones((1, d_half), jnp.float32)
    p["bn2_beta"] = jnp.zeros((1, d_half), jnp.float32)
    p["bn2_mean"] = jnp.zeros((1, d_half), jnp.float32)
    p["bn2_var"] = jnp.ones((1, d_half), jnp.float32)
    p["dec_w2"] = xavier(next(keys), (d_half, 1), d_half, 1)
    p["dec_b2"] = jnp.zeros((1, 1), jnp.float32)
    return p


def stock_transformer_forward(params, src, nhead):
    """src: (B, S, input_dim) -> (B,). Eval-mode forward."""
    # TODO(synk): dropout layers are identity (inference semantics); train-mode
    # dropout / BatchNorm statistics updates are not implemented.
    B, S, F = src.shape
    D = params["emb_w"].shape[1]
    eps = 1e-5

    # --- embedding + BN1 (eval affine) + positional encoding, fused kernel ---
    scale1 = params["bn1_gamma"] / jnp.sqrt(params["bn1_var"] + eps)
    shift1 = params["bn1_beta"] - params["bn1_mean"] * scale1
    pe = positional_encoding(S, D)
    h = embed_bn_pe(src.reshape(B * S, F), params["emb_w"], params["emb_b"],
                    scale1, shift1, pe, S)                     # (B*S, D)

    # --- transformer encoder stack: one fused kernel per layer ---
    for lp in params["layers"]:
        h = encoder_layer(h, lp, B, S, nhead, eps=eps)

    # --- decoder head on the last time step ---
    last = h.reshape(B, S, D)[:, -1, :]                        # (B, D)
    scale2 = params["bn2_gamma"] / jnp.sqrt(params["bn2_var"] + eps)
    shift2 = params["bn2_beta"] - params["bn2_mean"] * scale2
    out = decoder_head(last, params["dec_w1"], params["dec_b1"],
                       scale2, shift2, params["dec_w2"], params["dec_b2"])   # (B, 1)
    return out[:, 0]                                           # (B,)


if __name__ == "__main__":
    B, S = 2, 8
    input_dim, d_model, nhead, num_layers, dim_ff = 4, 32, 4, 2, 64

    key = jax.random.PRNGKey(0)
    pkey, xkey = jax.random.split(key)
    params = init_params(pkey, input_dim, d_model, nhead, num_layers, dim_ff)
    src = jax.random.normal(xkey, (B, S, input_dim), jnp.float32)

    fwd = jax.jit(stock_transformer_forward, static_argnums=(2,))
    out = fwd(params, src, nhead)
    out = jax.block_until_ready(out)
    assert out.shape == (B,), out.shape
    assert bool(jnp.all(jnp.isfinite(out))), out
    print("KERNEL_OK")
</pallas_src>

<mosaic_0001>
module attributes {stable_mosaic.version = 11 : i64} {
  func.func @_embed_kernel(%arg0: i32, %arg1: memref<8x4xf32, #tpu.memory_space<vmem>>, %arg2: memref<4x32xf32, #tpu.memory_space<vmem>>, %arg3: memref<1x32xf32, #tpu.memory_space<vmem>>, %arg4: memref<1x32xf32, #tpu.memory_space<vmem>>, %arg5: memref<1x32xf32, #tpu.memory_space<vmem>>, %arg6: memref<8x32xf32, #tpu.memory_space<vmem>>, %arg7: memref<8x32xf32, #tpu.memory_space<vmem>>) attributes {dimension_semantics = [#tpu.dimension_semantics<parallel>], iteration_bounds = array<i64: 2>, scalar_prefetch = 0 : i64, scratch_operands = 0 : i64, tpu.core_type = #tpu.core_type<tc>, window_params = [{transform_indices = @transform_0, window_bounds = array<i64: 8, 4>}, {pipeline_mode = #tpu.pipeline_mode<synchronous>, transform_indices = @transform_1, window_bounds = array<i64: 4, 32>}, {pipeline_mode = #tpu.pipeline_mode<synchronous>, transform_indices = @transform_2, window_bounds = array<i64: 1, 32>}, {pipeline_mode = #tpu.pipeline_mode<synchronous>, transform_indices = @transform_3, window_bounds = array<i64: 1, 32>}, {pipeline_mode = #tpu.pipeline_mode<synchronous>, transform_indices = @transform_4, window_bounds = array<i64: 1, 32>}, {pipeline_mode = #tpu.pipeline_mode<synchronous>, transform_indices = @transform_5, window_bounds = array<i64: 8, 32>}, {transform_indices = @transform_6, window_bounds = array<i64: 8, 32>}]} {
    %c0 = arith.constant 0 : index
    %c0_0 = arith.constant 0 : index
    %0 = vector.load %arg1[%c0, %c0_0] : memref<8x4xf32, #tpu.memory_space<vmem>>, vector<8x4xf32>
    %c0_1 = arith.constant 0 : index
    %c0_2 = arith.constant 0 : index
    %1 = vector.load %arg2[%c0_1, %c0_2] : memref<4x32xf32, #tpu.memory_space<vmem>>, vector<4x32xf32>
    %cst = arith.constant dense<0.000000e+00> : vector<8x32xf32>
    %2 = tpu.matmul %0, %1, %cst {dimension_numbers = #tpu.dot_dimension_numbers<[1], [0], [0], [1], [0, 0, 1, 1], [], []>} : vector<8x4xf32>, vector<4x32xf32>, vector<8x32xf32> -> vector<8x32xf32>
    %c0_3 = arith.constant 0 : index
    %c0_4 = arith.constant 0 : index
    %3 = vector.load %arg3[%c0_3, %c0_4] : memref<1x32xf32, #tpu.memory_space<vmem>>, vector<1x32xf32>
    %4 = vector.broadcast %3 : vector<1x32xf32> to vector<8x32xf32>
    %5 = arith.addf %2, %4 : vector<8x32xf32>
    %c0_5 = arith.constant 0 : index
    %c0_6 = arith.constant 0 : index
    %6 = vector.load %arg4[%c0_5, %c0_6] : memref<1x32xf32, #tpu.memory_space<vmem>>, vector<1x32xf32>
    %7 = vector.broadcast %6 : vector<1x32xf32> to vector<8x32xf32>
    %8 = arith.mulf %5, %7 : vector<8x32xf32>
    %c0_7 = arith.constant 0 : index
    %c0_8 = arith.constant 0 : index
    %9 = vector.load %arg5[%c0_7, %c0_8] : memref<1x32xf32, #tpu.memory_space<vmem>>, vector<1x32xf32>
    %10 = vector.broadcast %9 : vector<1x32xf32> to vector<8x32xf32>
    %11 = arith.addf %8, %10 : vector<8x32xf32>
    %c0_9 = arith.constant 0 : index
    %c0_10 = arith.constant 0 : index
    %12 = vector.load %arg6[%c0_9, %c0_10] : memref<8x32xf32, #tpu.memory_space<vmem>>, vector<8x32xf32>
    %13 = arith.addf %11, %12 : vector<8x32xf32>
    %c0_11 = arith.constant 0 : index
    %c0_12 = arith.constant 0 : index
    %14 = vector.load %arg7[%c0_11, %c0_12] : memref<8x32xf32, #tpu.memory_space<vmem>>, vector<8x32xf32>
    tpu.vector_store %arg7[%c0_11, %c0_12], %13 {strides = array<i32>} : memref<8x32xf32, #tpu.memory_space<vmem>>, vector<8x32xf32>,
    return
  }
  func.func @transform_0(%arg0: i32) -> (i32, i32) {
    %c0_i32 = arith.constant 0 : i32
    %c0_i32_0 = arith.constant 0 : i32
    return %arg0, %c0_i32 : i32, i32
  }
  func.func @transform_1(%arg0: i32) -> (i32, i32) {
    %c0_i32 = arith.constant 0 : i32
    %c0_i32_0 = arith.constant 0 : i32
    %c0_i32_1 = arith.constant 0 : i32
    return %c0_i32, %c0_i32_0 : i32, i32
  }
  func.func @transform_2(%arg0: i32) -> (i32, i32) {
    %c0_i32 = arith.constant 0 : i32
    %c0_i32_0 = arith.constant 0 : i32
    %c0_i32_1 = arith.constant 0 : i32
    return %c0_i32, %c0_i32_0 : i32, i32
  }
  func.func @transform_3(%arg0: i32) -> (i32, i32) {
    %c0_i32 = arith.constant 0 : i32
    %c0_i32_0 = arith.constant 0 : i32
    %c0_i32_1 = arith.constant 0 : i32
    return %c0_i32, %c0_i32_0 : i32, i32
  }
  func.func @transform_4(%arg0: i32) -> (i32, i32) {
    %c0_i32 = arith.constant 0 : i32
    %c0_i32_0 = arith.constant 0 : i32
    %c0_i32_1 = arith.constant 0 : i32
    return %c0_i32, %c0_i32_0 : i32, i32
  }
  func.func @transform_5(%arg0: i32) -> (i32, i32) {
    %c0_i32 = arith.constant 0 : i32
    %c0_i32_0 = arith.constant 0 : i32
    %c0_i32_1 = arith.constant 0 : i32
    return %c0_i32, %c0_i32_0 : i32, i32
  }
  func.func @transform_6(%arg0: i32) -> (i32, i32) {
    %c0_i32 = arith.constant 0 : i32
    %c0_i32_0 = arith.constant 0 : i32
    return %arg0, %c0_i32 : i32, i32
  }
}

module attributes {stable_mosaic.version = 11 : i64} {
  func.func @_encoder_layer_kernel(%arg0: i32, %arg1: memref<8x32xf32, #tpu.memory_space<vmem>>, %arg2: memref<32x96xf32, #tpu.memory_space<vmem>>, %arg3: memref<1x96xf32, #tpu.memory_space<vmem>>, %arg4: memref<32x32xf32, #tpu.memory_space<vmem>>, %arg5: memref<1x32xf32, #tpu.memory_space<vmem>>, %arg6: memref<1x32xf32, #tpu.memory_space<vmem>>, %arg7: memref<1x32xf32, #tpu.memory_space<vmem>>, %arg8: memref<32x64xf32, #tpu.memory_space<vmem>>, %arg9: memref<1x64xf32, #tpu.memory_space<vmem>>, %arg10: memref<64x32xf32, #tpu.memory_space<vmem>>, %arg11: memref<1x32xf32, #tpu.memory_space<vmem>>, %arg12: memref<1x32xf32, #tpu.memory_space<vmem>>, %arg13: memref<1x32xf32, #tpu.memory_space<vmem>>, %arg14: memref<8x32xf32, #tpu.memory_space<vmem>>) attributes {dimension_semantics = [#tpu.dimension_semantics<parallel>], iteration_bounds = array<i64: 2>, scalar_prefetch = 0 : i64, scratch_operands = 0 : i64, tpu.core_type = #tpu.core_type<tc>, window_params = [{transform_indices = @transform_0, window_bounds = array<i64: 8, 32>}, {pipeline_mode = #tpu.pipeline_mode<synchronous>, transform_indices = @transform_1, window_bounds = array<i64: 32, 96>}, {pipeline_mode = #tpu.pipeline_mode<synchronous>, transform_indices = @transform_2, window_bounds = array<i64: 1, 96>}, {pipeline_mode = #tpu.pipeline_mode<synchronous>, transform_indices = @transform_3, window_bounds = array<i64: 32, 32>}, {pipeline_mode = #tpu.pipeline_mode<synchronous>, transform_indices = @transform_4, window_bounds = array<i64: 1, 32>}, {pipeline_mode = #tpu.pipeline_mode<synchronous>, transform_indices = @transform_5, window_bounds = array<i64: 1, 32>}, {pipeline_mode = #tpu.pipeline_mode<synchronous>, transform_indices = @transform_6, window_bounds = array<i64: 1, 32>}, {pipeline_mode = #tpu.pipeline_mode<synchronous>, transform_indices = @transform_7, window_bounds = array<i64: 32, 64>}, {pipeline_mode = #tpu.pipeline_mode<synchronous>, transform_indices = @transform_8, window_bounds = array<i64: 1, 64>}, {pipeline_mode = #tpu.pipeline_mode<synchronous>, transform_indices = @transform_9, window_bounds = array<i64: 64, 32>}, {pipeline_mode = #tpu.pipeline_mode<synchronous>, transform_indices = @transform_10, window_bounds = array<i64: 1, 32>}, {pipeline_mode = #tpu.pipeline_mode<synchronous>, transform_indices = @transform_11, window_bounds = array<i64: 1, 32>}, {pipeline_mode = #tpu.pipeline_mode<synchronous>, transform_indices = @transform_12, window_bounds = array<i64: 1, 32>}, {transform_indices = @transform_13, window_bounds = array<i64: 8, 32>}]} {
    %c0 = arith.constant 0 : index
    %c0_0 = arith.constant 0 : index
    %0 = vector.load %arg1[%c0, %c0_0] : memref<8x32xf32, #tpu.memory_space<vmem>>, vector<8x32xf32>
    %c0_1 = arith.constant 0 : index
    %c0_2 = arith.constant 0 : index
    %1 = vector.load %arg2[%c0_1, %c0_2] : memref<32x96xf32, #tpu.memory_space<vmem>>, vector<32x96xf32>
    %cst = arith.constant dense<0.000000e+00> : vector<8x96xf32>
    %2 = tpu.matmul %0, %1, %cst {dimension_numbers = #tpu.dot_dimension_numbers<[1], [0], [0], [1], [0, 0, 1, 1], [], []>} : vector<8x32xf32>, vector<32x96xf32>, vector<8x96xf32> -> vector<8x96xf32>
    %c0_3 = arith.constant 0 : index
    %c0_4 = arith.constant 0 : index
    %3 = vector.load %arg3[%c0_3, %c0_4] : memref<1x96xf32, #tpu.memory_space<vmem>>, vector<1x96xf32>
    %4 = vector.broadcast %3 : vector<1x96xf32> to vector<8x96xf32>
    %5 = arith.addf %2, %4 : vector<8x96xf32>
    %6 = vector.extract_strided_slice %5 {offsets = [0, 0], sizes = [8, 8], strides = [1, 1]} : vector<8x96xf32> to vector<8x8xf32>
    %7 = vector.extract_strided_slice %5 {offsets = [0, 32], sizes = [8, 8], strides = [1, 1]} : vector<8x96xf32> to vector<8x8xf32>
    %8 = vector.extract_strided_slice %5 {offsets = [0, 64], sizes = [8, 8], strides = [1, 1]} : vector<8x96xf32> to vector<8x8xf32>
    %cst_5 = arith.constant dense<0.000000e+00> : vector<8x8xf32>
    %9 = tpu.matmul %6, %7, %cst_5 {dimension_numbers = #tpu.dot_dimension_numbers<[1], [1], [0], [0], [0, 0, 1, 0], [], []>} : vector<8x8xf32>, vector<8x8xf32>, vector<8x8xf32> -> vector<8x8xf32>
    %cst_6 = arith.constant 0.353553385 : f32
    %10 = vector.broadcast %cst_6 : f32 to vector<8x8xf32>
    %11 = arith.mulf %9, %10 : vector<8x8xf32>
    %cst_7 = arith.constant dense<0xFF800000> : vector<8xf32>
    %12 = vector.multi_reduction <maximumf>, %11, %cst_7 [1] : vector<8x8xf32> to vector<8xf32>
    %13 = vector.shape_cast %12 : vector<8xf32> to vector<8x1xf32>
    %14 = vector.broadcast %13 : vector<8x1xf32> to vector<8x8xf32>
    %15 = arith.subf %11, %14 : vector<8x8xf32>
    %16 = math.exp %15 : vector<8x8xf32>
    %cst_8 = arith.constant dense<0.000000e+00> : vector<8xf32>
    %17 = vector.multi_reduction <add>, %16, %cst_8 [1] : vector<8x8xf32> to vector<8xf32>
    %18 = vector.shape_cast %17 : vector<8xf32> to vector<8x1xf32>
    %19 = vector.broadcast %18 : vector<8x1xf32> to vector<8x8xf32>
    %20 = arith.divf %16, %19 : vector<8x8xf32>
    %cst_9 = arith.constant dense<0.000000e+00> : vector<8x8xf32>
    %21 = tpu.matmul %20, %8, %cst_9 {dimension_numbers = #tpu.dot_dimension_numbers<[1], [0], [0], [1], [0, 0, 1, 1], [], []>} : vector<8x8xf32>, vector<8x8xf32>, vector<8x8xf32> -> vector<8x8xf32>
    %22 = vector.extract_strided_slice %5 {offsets = [0, 8], sizes = [8, 8], strides = [1, 1]} : vector<8x96xf32> to vector<8x8xf32>
    %23 = vector.extract_strided_slice %5 {offsets = [0, 40], sizes = [8, 8], strides = [1, 1]} : vector<8x96xf32> to vector<8x8xf32>
    %24 = vector.extract_strided_slice %5 {offsets = [0, 72], sizes = [8, 8], strides = [1, 1]} : vector<8x96xf32> to vector<8x8xf32>
    %cst_10 = arith.constant dense<0.000000e+00> : vector<8x8xf32>
    %25 = tpu.matmul %22, %23, %cst_10 {dimension_numbers = #tpu.dot_dimension_numbers<[1], [1], [0], [0], [0, 0, 1, 0], [], []>} : vector<8x8xf32>, vector<8x8xf32>, vector<8x8xf32> -> vector<8x8xf32>
    %cst_11 = arith.constant 0.353553385 : f32
    %26 = vector.broadcast %cst_11 : f32 to vector<8x8xf32>
    %27 = arith.mulf %25, %26 : vector<8x8xf32>
    %cst_12 = arith.constant dense<0xFF800000> : vector<8xf32>
    %28 = vector.multi_reduction <maximumf>, %27, %cst_12 [1] : vector<8x8xf32> to vector<8xf32>
    %29 = vector.shape_cast %28 : vector<8xf32> to vector<8x1xf32>
    %30 = vector.broadcast %29 : vector<8x1xf32> to vector<8x8xf32>
    %31 = arith.subf %27, %30 : vector<8x8xf32>
    %32 = math.exp %31 : vector<8x8xf32>
    %cst_13 = arith.constant dense<0.000000e+00> : vector<8xf32>
    %33 = vector.multi_reduction <add>, %32, %cst_13 [1] : vector<8x8xf32> to vector<8xf32>
    %34 = vector.shape_cast %33 : vector<8xf32> to vector<8x1xf32>
    %35 = vector.broadcast %34 : vector<8x1xf32> to vector<8x8xf32>
    %36 = arith.divf %32, %35 : vector<8x8xf32>
    %cst_14 = arith.constant dense<0.000000e+00> : vector<8x8xf32>
    %37 = tpu.matmul %36, %24, %cst_14 {dimension_numbers = #tpu.dot_dimension_numbers<[1], [0], [0], [1], [0, 0, 1, 1], [], []>} : vector<8x8xf32>, vector<8x8xf32>, vector<8x8xf32> -> vector<8x8xf32>
    %38 = vector.extract_strided_slice %5 {offsets = [0, 16], sizes = [8, 8], strides = [1, 1]} : vector<8x96xf32> to vector<8x8xf32>
    %39 = vector.extract_strided_slice %5 {offsets = [0, 48], sizes = [8, 8], strides = [1, 1]} : vector<8x96xf32> to vector<8x8xf32>
    %40 = vector.extract_strided_slice %5 {offsets = [0, 80], sizes = [8, 8], strides = [1, 1]} : vector<8x96xf32> to vector<8x8xf32>
    %cst_15 = arith.constant dense<0.000000e+00> : vector<8x8xf32>
    %41 = tpu.matmul %38, %39, %cst_15 {dimension_numbers = #tpu.dot_dimension_numbers<[1], [1], [0], [0], [0, 0, 1, 0], [], []>} : vector<8x8xf32>, vector<8x8xf32>, vector<8x8xf32> -> vector<8x8xf32>
    %cst_16 = arith.constant 0.353553385 : f32
    %42 = vector.broadcast %cst_16 : f32 to vector<8x8xf32>
    %43 = arith.mulf %41, %42 : vector<8x8xf32>
    %cst_17 = arith.constant dense<0xFF800000> : vector<8xf32>
    %44 = vector.multi_reduction <maximumf>, %43, %cst_17 [1] : vector<8x8xf32> to vector<8xf32>
    %45 = vector.shape_cast %44 : vector<8xf32> to vector<8x1xf32>
    %46 = vector.broadcast %45 : vector<8x1xf32> to vector<8x8xf32>
    %47 = arith.subf %43, %46 : vector<8x8xf32>
    %48 = math.exp %47 : vector<8x8xf32>
    %cst_18 = arith.constant dense<0.000000e+00> : vector<8xf32>
    %49 = vector.multi_reduction <add>, %48, %cst_18 [1] : vector<8x8xf32> to vector<8xf32>
    %50 = vector.shape_cast %49 : vector<8xf32> to vector<8x1xf32>
    %51 = vector.broadcast %50 : vector<8x1xf32> to vector<8x8xf32>
    %52 = arith.divf %48, %51 : vector<8x8xf32>
    %cst_19 = arith.constant dense<0.000000e+00> : vector<8x8xf32>
    %53 = tpu.matmul %52, %40, %cst_19 {dimension_numbers = #tpu.dot_dimension_numbers<[1], [0], [0], [1], [0, 0, 1, 1], [], []>} : vector<8x8xf32>, vector<8x8xf32>, vector<8x8xf32> -> vector<8x8xf32>
    %54 = vector.extract_strided_slice %5 {offsets = [0, 24], sizes = [8, 8], strides = [1, 1]} : vector<8x96xf32> to vector<8x8xf32>
    %55 = vector.extract_strided_slice %5 {offsets = [0, 56], sizes = [8, 8], strides = [1, 1]} : vector<8x96xf32> to vector<8x8xf32>
    %56 = vector.extract_strided_slice %5 {offsets = [0, 88], sizes = [8, 8], strides = [1, 1]} : vector<8x96xf32> to vector<8x8xf32>
    %cst_20 = arith.constant dense<0.000000e+00> : vector<8x8xf32>
    %57 = tpu.matmul %54, %55, %cst_20 {dimension_numbers = #tpu.dot_dimension_numbers<[1], [1], [0], [0], [0, 0, 1, 0], [], []>} : vector<8x8xf32>, vector<8x8xf32>, vector<8x8xf32> -> vector<8x8xf32>
    %cst_21 = arith.constant 0.353553385 : f32
    %58 = vector.broadcast %cst_21 : f32 to vector<8x8xf32>
    %59 = arith.mulf %57, %58 : vector<8x8xf32>
    %cst_22 = arith.constant dense<0xFF800000> : vector<8xf32>
    %60 = vector.multi_reduction <maximumf>, %59, %cst_22 [1] : vector<8x8xf32> to vector<8xf32>
    %61 = vector.shape_cast %60 : vector<8xf32> to vector<8x1xf32>
    %62 = vector.broadcast %61 : vector<8x1xf32> to vector<8x8xf32>
    %63 = arith.subf %59, %62 : vector<8x8xf32>
    %64 = math.exp %63 : vector<8x8xf32>
    %cst_23 = arith.constant dense<0.000000e+00> : vector<8xf32>
    %65 = vector.multi_reduction <add>, %64, %cst_23 [1] : vector<8x8xf32> to vector<8xf32>
    %66 = vector.shape_cast %65 : vector<8xf32> to vector<8x1xf32>
    %67 = vector.broadcast %66 : vector<8x1xf32> to vector<8x8xf32>
    %68 = arith.divf %64, %67 : vector<8x8xf32>
    %cst_24 = arith.constant dense<0.000000e+00> : vector<8x8xf32>
    %69 = tpu.matmul %68, %56, %cst_24 {dimension_numbers = #tpu.dot_dimension_numbers<[1], [0], [0], [1], [0, 0, 1, 1], [], []>} : vector<8x8xf32>, vector<8x8xf32>, vector<8x8xf32> -> vector<8x8xf32>
    %70 = tpu.concatenate %21, %37, %53, %69 in 1 : vector<8x8xf32>, vector<8x8xf32>, vector<8x8xf32>, vector<8x8xf32> -> vector<8x32xf32>
    %c0_25 = arith.constant 0 : index
    %c0_26 = arith.constant 0 : index
    %71 = vector.load %arg4[%c0_25, %c0_26] : memref<32x32xf32, #tpu.memory_space<vmem>>, vector<32x32xf32>
    %cst_27 = arith.constant dense<0.000000e+00> : vector<8x32xf32>
    %72 = tpu.matmul %70, %71, %cst_27 {dimension_numbers = #tpu.dot_dimension_numbers<[1], [0], [0], [1], [0, 0, 1, 1], [], []>} : vector<8x32xf32>, vector<32x32xf32>, vector<8x32xf32> -> vector<8x32xf32>
    %73 = arith.addf %0, %72 : vector<8x32xf32>
    %c0_28 = arith.constant 0 : index
    %c0_29 = arith.constant 0 : index
    %74 = vector.load %arg5[%c0_28, %c0_29] : memref<1x32xf32, #tpu.memory_space<vmem>>, vector<1x32xf32>
    %75 = vector.broadcast %74 : vector<1x32xf32> to vector<8x32xf32>
    %76 = arith.addf %73, %75 : vector<8x32xf32>
    %cst_30 = arith.constant dense<0.000000e+00> : vector<8xf32>
    %77 = vector.multi_reduction <add>, %76, %cst_30 [1] : vector<8x32xf32> to vector<8xf32>
    %78 = vector.shape_cast %77 : vector<8xf32> to vector<8x1xf32>
    %cst_31 = arith.constant 3.200000e+01 : f32
    %79 = vector.broadcast %cst_31 : f32 to vector<8x1xf32>
    %80 = arith.divf %78, %79 : vector<8x1xf32>
    %81 = vector.broadcast %80 : vector<8x1xf32> to vector<8x32xf32>
    %82 = arith.subf %76, %81 : vector<8x32xf32>
    %83 = arith.mulf %82, %82 : vector<8x32xf32>
    %cst_32 = arith.constant dense<0.000000e+00> : vector<8xf32>
    %84 = vector.multi_reduction <add>, %83, %cst_32 [1] : vector<8x32xf32> to vector<8xf32>
    %85 = vector.shape_cast %84 : vector<8xf32> to vector<8x1xf32>
    %cst_33 = arith.constant 3.200000e+01 : f32
    %86 = vector.broadcast %cst_33 : f32 to vector<8x1xf32>
    %87 = arith.divf %85, %86 : vector<8x1xf32>
    %88 = vector.broadcast %80 : vector<8x1xf32> to vector<8x32xf32>
    %89 = arith.subf %76, %88 : vector<8x32xf32>
    %cst_34 = arith.constant 9.99999974E-6 : f32
    %90 = vector.broadcast %cst_34 : f32 to vector<8x1xf32>
    %91 = arith.addf %87, %90 : vector<8x1xf32>
    %92 = math.rsqrt %91 : vector<8x1xf32>
    %93 = vector.broadcast %92 : vector<8x1xf32> to vector<8x32xf32>
    %94 = arith.mulf %89, %93 : vector<8x32xf32>
    %c0_35 = arith.constant 0 : index
    %c0_36 = arith.constant 0 : index
    %95 = vector.load %arg6[%c0_35, %c0_36] : memref<1x32xf32, #tpu.memory_space<vmem>>, vector<1x32xf32>
    %96 = vector.broadcast %95 : vector<1x32xf32> to vector<8x32xf32>
    %97 = arith.mulf %94, %96 : vector<8x32xf32>
    %c0_37 = arith.constant 0 : index
    %c0_38 = arith.constant 0 : index
    %98 = vector.load %arg7[%c0_37, %c0_38] : memref<1x32xf32, #tpu.memory_space<vmem>>, vector<1x32xf32>
    %99 = vector.broadcast %98 : vector<1x32xf32> to vector<8x32xf32>
    %100 = arith.addf %97, %99 : vector<8x32xf32>
    %c0_39 = arith.constant 0 : index
    %c0_40 = arith.constant 0 : index
    %101 = vector.load %arg8[%c0_39, %c0_40] : memref<32x64xf32, #tpu.memory_space<vmem>>, vector<32x64xf32>
    %cst_41 = arith.constant dense<0.000000e+00> : vector<8x64xf32>
    %102 = tpu.matmul %100, %101, %cst_41 {dimension_numbers = #tpu.dot_dimension_numbers<[1], [0], [0], [1], [0, 0, 1, 1], [], []>} : vector<8x32xf32>, vector<32x64xf32>, vector<8x64xf32> -> vector<8x64xf32>
    %c0_42 = arith.constant 0 : index
    %c0_43 = arith.constant 0 : index
    %103 = vector.load %arg9[%c0_42, %c0_43] : memref<1x64xf32, #tpu.memory_space<vmem>>, vector<1x64xf32>
    %104 = vector.broadcast %103 : vector<1x64xf32> to vector<8x64xf32>
    %105 = arith.addf %102, %104 : vector<8x64xf32>
    %cst_44 = arith.constant 0.000000e+00 : f32
    %106 = vector.broadcast %cst_44 : f32 to vector<8x64xf32>
    %107 = arith.maximumf %105, %106 : vector<8x64xf32>
    %c0_45 = arith.constant 0 : index
    %c0_46 = arith.constant 0 : index
    %108 = vector.load %arg10[%c0_45, %c0_46] : memref<64x32xf32, #tpu.memory_space<vmem>>, vector<64x32xf32>
    %cst_47 = arith.constant dense<0.000000e+00> : vector<8x32xf32>
    %109 = tpu.matmul %107, %108, %cst_47 {dimension_numbers = #tpu.dot_dimension_numbers<[1], [0], [0], [1], [0, 0, 1, 1], [], []>} : vector<8x64xf32>, vector<64x32xf32>, vector<8x32xf32> -> vector<8x32xf32>
    %c0_48 = arith.constant 0 : index
    %c0_49 = arith.constant 0 : index
    %110 = vector.load %arg11[%c0_48, %c0_49] : memref<1x32xf32, #tpu.memory_space<vmem>>, vector<1x32xf32>
    %111 = vector.broadcast %110 : vector<1x32xf32> to vector<8x32xf32>
    %112 = arith.addf %109, %111 : vector<8x32xf32>
    %113 = arith.addf %100, %112 : vector<8x32xf32>
    %cst_50 = arith.constant dense<0.000000e+00> : vector<8xf32>
    %114 = vector.multi_reduction <add>, %113, %cst_50 [1] : vector<8x32xf32> to vector<8xf32>
    %115 = vector.shape_cast %114 : vector<8xf32> to vector<8x1xf32>
    %cst_51 = arith.constant 3.200000e+01 : f32
    %116 = vector.broadcast %cst_51 : f32 to vector<8x1xf32>
    %117 = arith.divf %115, %116 : vector<8x1xf32>
    %118 = vector.broadcast %117 : vector<8x1xf32> to vector<8x32xf32>
    %119 = arith.subf %113, %118 : vector<8x32xf32>
    %120 = arith.mulf %119, %119 : vector<8x32xf32>
    %cst_52 = arith.constant dense<0.000000e+00> : vector<8xf32>
    %121 = vector.multi_reduction <add>, %120, %cst_52 [1] : vector<8x32xf32> to vector<8xf32>
    %122 = vector.shape_cast %121 : vector<8xf32> to vector<8x1xf32>
    %cst_53 = arith.constant 3.200000e+01 : f32
    %123 = vector.broadcast %cst_53 : f32 to vector<8x1xf32>
    %124 = arith.divf %122, %123 : vector<8x1xf32>
    %125 = vector.broadcast %117 : vector<8x1xf32> to vector<8x32xf32>
    %126 = arith.subf %113, %125 : vector<8x32xf32>
    %cst_54 = arith.constant 9.99999974E-6 : f32
    %127 = vector.broadcast %cst_54 : f32 to vector<8x1xf32>
    %128 = arith.addf %124, %127 : vector<8x1xf32>
    %129 = math.rsqrt %128 : vector<8x1xf32>
    %130 = vector.broadcast %129 : vector<8x1xf32> to vector<8x32xf32>
    %131 = arith.mulf %126, %130 : vector<8x32xf32>
    %c0_55 = arith.constant 0 : index
    %c0_56 = arith.constant 0 : index
    %132 = vector.load %arg12[%c0_55, %c0_56] : memref<1x32xf32, #tpu.memory_space<vmem>>, vector<1x32xf32>
    %133 = vector.broadcast %132 : vector<1x32xf32> to vector<8x32xf32>
    %134 = arith.mulf %131, %133 : vector<8x32xf32>
    %c0_57 = arith.constant 0 : index
    %c0_58 = arith.constant 0 : index
    %135 = vector.load %arg13[%c0_57, %c0_58] : memref<1x32xf32, #tpu.memory_space<vmem>>, vector<1x32xf32>
    %136 = vector.broadcast %135 : vector<1x32xf32> to vector<8x32xf32>
    %137 = arith.addf %134, %136 : vector<8x32xf32>
    %c0_59 = arith.constant 0 : index
    %c0_60 = arith.constant 0 : index
    %138 = vector.load %arg14[%c0_59, %c0_60] : memref<8x32xf32, #tpu.memory_space<vmem>>, vector<8x32xf32>
    tpu.vector_store %arg14[%c0_59, %c0_60], %137 {strides = array<i32>} : memref<8x32xf32, #tpu.memory_space<vmem>>, vector<8x32xf32>,
    return
  }
  func.func @transform_0(%arg0: i32) -> (i32, i32) {
    %c0_i32 = arith.constant 0 : i32
    %c0_i32_0 = arith.constant 0 : i32
    return %arg0, %c0_i32 : i32, i32
  }
  func.func @transform_1(%arg0: i32) -> (i32, i32) {
    %c0_i32 = arith.constant 0 : i32
    %c0_i32_0 = arith.constant 0 : i32
    %c0_i32_1 = arith.constant 0 : i32
    return %c0_i32, %c0_i32_0 : i32, i32
  }
  func.func @transform_2(%arg0: i32) -> (i32, i32) {
    %c0_i32 = arith.constant 0 : i32
    %c0_i32_0 = arith.constant 0 : i32
    %c0_i32_1 = arith.constant 0 : i32
    return %c0_i32, %c0_i32_0 : i32, i32
  }
  func.func @transform_3(%arg0: i32) -> (i32, i32) {
    %c0_i32 = arith.constant 0 : i32
    %c0_i32_0 = arith.constant 0 : i32
    %c0_i32_1 = arith.constant 0 : i32
    return %c0_i32, %c0_i32_0 : i32, i32
  }
  func.func @transform_4(%arg0: i32) -> (i32, i32) {
    %c0_i32 = arith.constant 0 : i32
    %c0_i32_0 = arith.constant 0 : i32
    %c0_i32_1 = arith.constant 0 : i32
    return %c0_i32, %c0_i32_0 : i32, i32
  }
  func.func @transform_5(%arg0: i32) -> (i32, i32) {
    %c0_i32 = arith.constant 0 : i32
    %c0_i32_0 = arith.constant 0 : i32
    %c0_i32_1 = arith.constant 0 : i32
    return %c0_i32, %c0_i32_0 : i32, i32
  }
  func.func @transform_6(%arg0: i32) -> (i32, i32) {
    %c0_i32 = arith.constant 0 : i32
    %c0_i32_0 = arith.constant 0 : i32
    %c0_i32_1 = arith.constant 0 : i32
    return %c0_i32, %c0_i32_0 : i32, i32
  }
  func.func @transform_7(%arg0: i32) -> (i32, i32) {
    %c0_i32 = arith.constant 0 : i32
    %c0_i32_0 = arith.constant 0 : i32
    %c0_i32_1 = arith.constant 0 : i32
    return %c0_i32, %c0_i32_0 : i32, i32
  }
  func.func @transform_8(%arg0: i32) -> (i32, i32) {
    %c0_i32 = arith.constant 0 : i32
    %c0_i32_0 = arith.constant 0 : i32
    %c0_i32_1 = arith.constant 0 : i32
    return %c0_i32, %c0_i32_0 : i32, i32
  }
  func.func @transform_9(%arg0: i32) -> (i32, i32) {
    %c0_i32 = arith.constant 0 : i32
    %c0_i32_0 = arith.constant 0 : i32
    %c0_i32_1 = arith.constant 0 : i32
    return %c0_i32, %c0_i32_0 : i32, i32
  }
  func.func @transform_10(%arg0: i32) -> (i32, i32) {
    %c0_i32 = arith.constant 0 : i32
    %c0_i32_0 = arith.constant 0 : i32
    %c0_i32_1 = arith.constant 0 : i32
    return %c0_i32, %c0_i32_0 : i32, i32
  }
  func.func @transform_11(%arg0: i32) -> (i32, i32) {
    %c0_i32 = arith.constant 0 : i32
    %c0_i32_0 = arith.constant 0 : i32
    %c0_i32_1 = arith.constant 0 : i32
    return %c0_i32, %c0_i32_0 : i32, i32
  }
  func.func @transform_12(%arg0: i32) -> (i32, i32) {
    %c0_i32 = arith.constant 0 : i32
    %c0_i32_0 = arith.constant 0 : i32
    %c0_i32_1 = arith.constant 0 : i32
    return %c0_i32, %c0_i32_0 : i32, i32
  }
  func.func @transform_13(%arg0: i32) -> (i32, i32) {
    %c0_i32 = arith.constant 0 : i32
    %c0_i32_0 = arith.constant 0 : i32
    return %arg0, %c0_i32 : i32, i32
  }
}

module attributes {stable_mosaic.version = 11 : i64} {
  func.func @_decoder_kernel(%arg0: i32, %arg1: memref<2x32xf32, #tpu.memory_space<vmem>>, %arg2: memref<32x16xf32, #tpu.memory_space<vmem>>, %arg3: memref<1x16xf32, #tpu.memory_space<vmem>>, %arg4: memref<1x16xf32, #tpu.memory_space<vmem>>, %arg5: memref<1x16xf32, #tpu.memory_space<vmem>>, %arg6: memref<1x16xf32, #tpu.memory_space<vmem>>, %arg7: memref<1x1xf32, #tpu.memory_space<vmem>>, %arg8: memref<2x1xf32, #tpu.memory_space<vmem>>) attributes {dimension_semantics = [#tpu.dimension_semantics<parallel>], iteration_bounds = array<i64: 1>, scalar_prefetch = 0 : i64, scratch_operands = 0 : i64, tpu.core_type = #tpu.core_type<tc>, window_params = [{transform_indices = @transform_0, window_bounds = array<i64: 2, 32>}, {pipeline_mode = #tpu.pipeline_mode<synchronous>, transform_indices = @transform_1, window_bounds = array<i64: 32, 16>}, {pipeline_mode = #tpu.pipeline_mode<synchronous>, transform_indices = @transform_2, window_bounds = array<i64: 1, 16>}, {pipeline_mode = #tpu.pipeline_mode<synchronous>, transform_indices = @transform_3, window_bounds = array<i64: 1, 16>}, {pipeline_mode = #tpu.pipeline_mode<synchronous>, transform_indices = @transform_4, window_bounds = array<i64: 1, 16>}, {pipeline_mode = #tpu.pipeline_mode<synchronous>, transform_indices = @transform_5, window_bounds = array<i64: 1, 16>}, {pipeline_mode = #tpu.pipeline_mode<synchronous>, transform_indices = @transform_6, window_bounds = array<i64: 1, 1>}, {transform_indices = @transform_7, window_bounds = array<i64: 2, 1>}]} {
    %c0 = arith.constant 0 : index
    %c0_0 = arith.constant 0 : index
    %0 = vector.load %arg1[%c0, %c0_0] : memref<2x32xf32, #tpu.memory_space<vmem>>, vector<2x32xf32>
    %c0_1 = arith.constant 0 : index
    %c0_2 = arith.constant 0 : index
    %1 = vector.load %arg2[%c0_1, %c0_2] : memref<32x16xf32, #tpu.memory_space<vmem>>, vector<32x16xf32>
    %cst = arith.constant dense<0.000000e+00> : vector<2x16xf32>
    %2 = tpu.matmul %0, %1, %cst {dimension_numbers = #tpu.dot_dimension_numbers<[1], [0], [0], [1], [0, 0, 1, 1], [], []>} : vector<2x32xf32>, vector<32x16xf32>, vector<2x16xf32> -> vector<2x16xf32>
    %c0_3 = arith.constant 0 : index
    %c0_4 = arith.constant 0 : index
    %3 = vector.load %arg3[%c0_3, %c0_4] : memref<1x16xf32, #tpu.memory_space<vmem>>, vector<1x16xf32>
    %4 = vector.broadcast %3 : vector<1x16xf32> to vector<2x16xf32>
    %5 = arith.addf %2, %4 : vector<2x16xf32>
    %c0_5 = arith.constant 0 : index
    %c0_6 = arith.constant 0 : index
    %6 = vector.load %arg4[%c0_5, %c0_6] : memref<1x16xf32, #tpu.memory_space<vmem>>, vector<1x16xf32>
    %7 = vector.broadcast %6 : vector<1x16xf32> to vector<2x16xf32>
    %8 = arith.mulf %5, %7 : vector<2x16xf32>
    %c0_7 = arith.constant 0 : index
    %c0_8 = arith.constant 0 : index
    %9 = vector.load %arg5[%c0_7, %c0_8] : memref<1x16xf32, #tpu.memory_space<vmem>>, vector<1x16xf32>
    %10 = vector.broadcast %9 : vector<1x16xf32> to vector<2x16xf32>
    %11 = arith.addf %8, %10 : vector<2x16xf32>
    %cst_9 = arith.constant 0.000000e+00 : f32
    %12 = vector.broadcast %cst_9 : f32 to vector<2x16xf32>
    %13 = arith.maximumf %11, %12 : vector<2x16xf32>
    %c0_10 = arith.constant 0 : index
    %c0_11 = arith.constant 0 : index
    %14 = vector.load %arg6[%c0_10, %c0_11] : memref<1x16xf32, #tpu.memory_space<vmem>>, vector<1x16xf32>
    %15 = vector.broadcast %14 : vector<1x16xf32> to vector<2x16xf32>
    %16 = arith.mulf %13, %15 : vector<2x16xf32>
    %cst_12 = arith.constant dense<0.000000e+00> : vector<2xf32>
    %17 = vector.multi_reduction <add>, %16, %cst_12 [1] : vector<2x16xf32> to vector<2xf32>
    %18 = vector.shape_cast %17 : vector<2xf32> to vector<2x1xf32>
    %c0_13 = arith.constant 0 : index
    %c0_14 = arith.constant 0 : index
    %19 = vector.load %arg7[%c0_13, %c0_14] : memref<1x1xf32, #tpu.memory_space<vmem>>, vector<1x1xf32>
    %20 = vector.broadcast %19 : vector<1x1xf32> to vector<2x1xf32>
    %21 = arith.addf %18, %20 : vector<2x1xf32>
    %c0_15 = arith.constant 0 : index
    %c0_16 = arith.constant 0 : index
    %22 = vector.load %arg8[%c0_15, %c0_16] : memref<2x1xf32, #tpu.memory_space<vmem>>, vector<2x1xf32>
    tpu.vector_store %arg8[%c0_15, %c0_16], %21 {strides = array<i32>} : memref<2x1xf32, #tpu.memory_space<vmem>>, vector<2x1xf32>,
    return
  }
  func.func @transform_0(%arg0: i32) -> (i32, i32) {
    %c0_i32 = arith.constant 0 : i32
    %c0_i32_0 = arith.constant 0 : i32
    return %arg0, %c0_i32 : i32, i32
  }
  func.func @transform_1(%arg0: i32) -> (i32, i32) {
    %c0_i32 = arith.constant 0 : i32
    %c0_i32_0 = arith.constant 0 : i32
    %c0_i32_1 = arith.constant 0 : i32
    return %c0_i32, %c0_i32_0 : i32, i32
  }
  func.func @transform_2(%arg0: i32) -> (i32, i32) {
    %c0_i32 = arith.constant 0 : i32
    %c0_i32_0 = arith.constant 0 : i32
    %c0_i32_1 = arith.constant 0 : i32
    return %c0_i32, %c0_i32_0 : i32, i32
  }
  func.func @transform_3(%arg0: i32) -> (i32, i32) {
    %c0_i32 = arith.constant 0 : i32
    %c0_i32_0 = arith.constant 0 : i32
    %c0_i32_1 = arith.constant 0 : i32
    return %c0_i32, %c0_i32_0 : i32, i32
  }
  func.func @transform_4(%arg0: i32) -> (i32, i32) {
    %c0_i32 = arith.constant 0 : i32
    %c0_i32_0 = arith.constant 0 : i32
    %c0_i32_1 = arith.constant 0 : i32
    return %c0_i32, %c0_i32_0 : i32, i32
  }
  func.func @transform_5(%arg0: i32) -> (i32, i32) {
    %c0_i32 = arith.constant 0 : i32
    %c0_i32_0 = arith.constant 0 : i32
    %c0_i32_1 = arith.constant 0 : i32
    return %c0_i32, %c0_i32_0 : i32, i32
  }
  func.func @transform_6(%arg0: i32) -> (i32, i32) {
    %c0_i32 = arith.constant 0 : i32
    %c0_i32_0 = arith.constant 0 : i32
    %c0_i32_1 = arith.constant 0 : i32
    return %c0_i32, %c0_i32_0 : i32, i32
  }
  func.func @transform_7(%arg0: i32) -> (i32, i32) {
    %c0_i32 = arith.constant 0 : i32
    %c0_i32_0 = arith.constant 0 : i32
    return %arg0, %c0_i32 : i32, i32
  }
}

</mosaic_0001>

<llo_original>
// kernel: stock_transformer_forward.4
$region0: #{stock_transformer_forward.4}
  #allocation0 [shape = 'u32[]', space=smem, size = 0x4, offset = 0x4, fixed_abs, tag = 'smem constant byte address 0x4 - core index']
  #allocation1 [shape = 'u32[144,128]{1,0:T(1,128)}', space=vmem, size = 0x12000, scoped, tag = 'internal scratch']
  %s0 = inlined_call_operand.vmem [shape: f32[16,4], index: 0, kind: input, shape index: {}]
  %s1 = inlined_call_operand.vmem [shape: f32[4,32], index: 1, kind: input, shape index: {}]
  %s2 = inlined_call_operand.vmem [shape: f32[1,32], index: 2, kind: input, shape index: {}]
  %s3 = inlined_call_operand.vmem [shape: f32[1,32], index: 3, kind: input, shape index: {}]
  %s4 = inlined_call_operand.vmem [shape: f32[1,32], index: 4, kind: input, shape index: {}]
  %s5 = inlined_call_operand.vmem [shape: f32[8,32], index: 5, kind: input, shape index: {}]
  %s6 = inlined_call_operand.vmem [shape: f32[16,32], index: 6, kind: output, shape index: {}]
  %s7 = sld [smem:[#allocation0]]
  $region57: #{stock_transformer_forward.4} parent=0
    _
  %s9 = ssub.s32 1, %s7
  %s10 = scalar_select 0, %s9, %s7
  loop: start=0, step=1, limit=4
  $region2: #{stock_transformer_forward.4} parent=0 // loop_pre_header
    _
  $region3: #{stock_transformer_forward.4} parent=0 // loop_header
    %s12 = sphi 0, %s16
    %p13 = scmp.ge.s32.totalorder %s12, 4
    %s22 = sphi 0, %s24
    %s25 = sphi 0, %s22
    %s26 = sphi 0, %s25
    %s42 = sphi 0, %s26
    %s46 = sphi 0, %s46
    %s48 = sphi 0, %s46
    %s49 = sphi 0, %s48
    %s63 = sphi 0, %s49
    %s67 = sphi 0, %s67
    %s69 = sphi 0, %s67
    %s70 = sphi 0, %s69
    %s84 = sphi 0, %s70
    %s88 = sphi 0, %s88
    %s90 = sphi 0, %s88
    %s91 = sphi 0, %s90
    %s105 = sphi 0, %s91
    %s109 = sphi 0, %s109
    %s111 = sphi 0, %s109
    %s112 = sphi 0, %s111
    %s126 = sphi 0, %s112
    %s130 = sphi 0, %s130
    %s132 = sphi 0, %s130
    %s133 = sphi 0, %s132
    %s147 = sphi 0, %s133
    %s153 = sphi 0, %s155
    %s156 = sphi 0, %s153
    %s157 = sphi 0, %s156
    %s173 = sphi 0, %s157
  $region4: #{stock_transformer_forward.4} parent=0 // loop_header_branch
    %15 = sbr.rel (%p13) target = $region8
  $region5: #{stock_transformer_forward.4} parent=0 // loop_body
    %s17 = ssub.s32 %s12, 1
    %s18 = ssub.s32 %s12, 2
    %s19 = sadd.s32 %s12, 1
    %s20 = ssub.s32 %s12, %s19
    %p21 = scmp.eq.s32.totalorder %s20, 0
    %s23 = sadd.s32 %s22, 1
    %s24 = scalar_select %p21, %s22, %s23
    %p27 = pneg %p21
    %p28 = scmp.eq.s32.totalorder %s12, 1
    %p29 = por %p27, %p28
    %p30 = scmp.ne.s32.totalorder %s22, %s25
    %p31 = scmp.eq.s32.totalorder %s12, 0
    %p32 = por %p30, %p31
    %p33 = scmp.ne.s32.totalorder %s22, %s25
    %p34 = scmp.eq.s32.totalorder %s17, 1
    %p35 = por %p33, %p34
    %p36 = scmp.ne.s32.totalorder %s25, %s26
    %p37 = scmp.eq.s32.totalorder %s17, 0
    %p38 = por %p36, %p37
    %p39 = scmp.ne.s32.totalorder %s25, %s26
    %p40 = scmp.eq.s32.totalorder %s18, 1
    %p41 = por %p39, %p40
    %p43 = scmp.ne.s32.totalorder %s26, %s42
    %p44 = scmp.eq.s32.totalorder %s18, 0
    %p45 = por %p43, %p44
    %s47 = sadd.s32 %s46, 1
    %p50 = scmp.eq.s32.totalorder %s12, 1
    %p51 = scmp.ne.s32.totalorder %s46, %s48
    %p52 = scmp.eq.s32.totalorder %s12, 0
    %p53 = por %p51, %p52
    %p54 = scmp.ne.s32.totalorder %s46, %s48
    %p55 = scmp.eq.s32.totalorder %s17, 1
    %p56 = por %p54, %p55
    %p57 = scmp.ne.s32.totalorder %s48, %s49
    %p58 = scmp.eq.s32.totalorder %s17, 0
    %p59 = por %p57, %p58
    %p60 = scmp.ne.s32.totalorder %s48, %s49
    %p61 = scmp.eq.s32.totalorder %s18, 1
    %p62 = por %p60, %p61
    %p64 = scmp.ne.s32.totalorder %s49, %s63
    %p65 = scmp.eq.s32.totalorder %s18, 0
    %p66 = por %p64, %p65
    %s68 = sadd.s32 %s67, 1
    %p71 = scmp.eq.s32.totalorder %s12, 1
    %p72 = scmp.ne.s32.totalorder %s67, %s69
    %p73 = scmp.eq.s32.totalorder %s12, 0
    %p74 = por %p72, %p73
    %p75 = scmp.ne.s32.totalorder %s67, %s69
    %p76 = scmp.eq.s32.totalorder %s17, 1
    %p77 = por %p75, %p76
    %p78 = scmp.ne.s32.totalorder %s69, %s70
    %p79 = scmp.eq.s32.totalorder %s17, 0
    %p80 = por %p78, %p79
    %p81 = scmp.ne.s32.totalorder %s69, %s70
    %p82 = scmp.eq.s32.totalorder %s18, 1
    %p83 = por %p81, %p82
    %p85 = scmp.ne.s32.totalorder %s70, %s84
    %p86 = scmp.eq.s32.totalorder %s18, 0
    %p87 = por %p85, %p86
    %s89 = sadd.s32 %s88, 1
    %p92 = scmp.eq.s32.totalorder %s12, 1
    %p93 = scmp.ne.s32.totalorder %s88, %s90
    %p94 = scmp.eq.s32.totalorder %s12, 0
    %p95 = por %p93, %p94
    %p96 = scmp.ne.s32.totalorder %s88, %s90
    %p97 = scmp.eq.s32.totalorder %s17, 1
    %p98 = por %p96, %p97
    %p99 = scmp.ne.s32.totalorder %s90, %s91
    %p100 = scmp.eq.s32.totalorder %s17, 0
    %p101 = por %p99, %p100
    %p102 = scmp.ne.s32.totalorder %s90, %s91
    %p103 = scmp.eq.s32.totalorder %s18, 1
    %p104 = por %p102, %p103
    %p106 = scmp.ne.s32.totalorder %s91, %s105
    %p107 = scmp.eq.s32.totalorder %s18, 0
    %p108 = por %p106, %p107
    %s110 = sadd.s32 %s109, 1
    %p113 = scmp.eq.s32.totalorder %s12, 1
    %p114 = scmp.ne.s32.totalorder %s109, %s111
    %p115 = scmp.eq.s32.totalorder %s12, 0
    %p116 = por %p114, %p115
    %p117 = scmp.ne.s32.totalorder %s109, %s111
    %p118 = scmp.eq.s32.totalorder %s17, 1
    %p119 = por %p117, %p118
    %p120 = scmp.ne.s32.totalorder %s111, %s112
    %p121 = scmp.eq.s32.totalorder %s17, 0
    %p122 = por %p120, %p121
    %p123 = scmp.ne.s32.totalorder %s111, %s112
    %p124 = scmp.eq.s32.totalorder %s18, 1
    %p125 = por %p123, %p124
    %p127 = scmp.ne.s32.totalorder %s112, %s126
    %p128 = scmp.eq.s32.totalorder %s18, 0
    %p129 = por %p127, %p128
    %s131 = sadd.s32 %s130, 1
    %p134 = scmp.eq.s32.totalorder %s12, 1
    %p135 = scmp.ne.s32.totalorder %s130, %s132
    %p136 = scmp.eq.s32.totalorder %s12, 0
    %p137 = por %p135, %p136
    %p138 = scmp.ne.s32.totalorder %s130, %s132
    %p139 = scmp.eq.s32.totalorder %s17, 1
    %p140 = por %p138, %p139
    %p141 = scmp.ne.s32.totalorder %s132, %s133
    %p142 = scmp.eq.s32.totalorder %s17, 0
    %p143 = por %p141, %p142
    %p144 = scmp.ne.s32.totalorder %s132, %s133
    %p145 = scmp.eq.s32.totalorder %s18, 1
    %p146 = por %p144, %p145
    %p148 = scmp.ne.s32.totalorder %s133, %s147
    %p149 = scmp.eq.s32.totalorder %s18, 0
    %p150 = por %p148, %p149
    %s151 = ssub.s32 %s12, %s19
    %p152 = scmp.eq.s32.totalorder %s151, 0
    %s154 = sadd.s32 %s153, 1
    %s155 = scalar_select %p152, %s153, %s154
    %p158 = pneg %p152
    %p159 = scmp.eq.s32.totalorder %s12, 1
    %p160 = por %p158, %p159
    %p161 = scmp.ne.s32.totalorder %s153, %s156
    %p162 = scmp.eq.s32.totalorder %s12, 0
    %p163 = por %p161, %p162
    %p164 = scmp.ne.s32.totalorder %s153, %s156
    %p165 = scmp.eq.s32.totalorder %s17, 1
    %p166 = por %p164, %p165
    %p167 = scmp.ne.s32.totalorder %s156, %s157
    %p168 = scmp.eq.s32.totalorder %s17, 0
    %p169 = por %p167, %p168
    %p170 = scmp.ne.s32.totalorder %s156, %s157
    %p171 = scmp.eq.s32.totalorder %s18, 1
    %p172 = por %p170, %p171
    %p174 = scmp.ne.s32.totalorder %s157, %s173
    %p175 = scmp.eq.s32.totalorder %s18, 0
    %p176 = por %p174, %p175
    %p177 = scmp.le.s32.totalorder 1, %s12
    %p178 = scmp.lt.s32.totalorder %s12, 3
    %p179 = pnand %p177, %p178
    %p180 = pneg %p179
    // Predicated region
    $region9: #{stock_transformer_forward.4} parent=5 // pred_check
      _
    $region10: #{stock_transformer_forward.4} parent=5 // pred_check_branch
      %182 = sbr.rel (%p179) target = $region12
    $region11: #{stock_transformer_forward.4} parent=5 // pred_region
      %s183 = ssub.s32 %s12, 1
      // Predicated region
      $region13: #{stock_transformer_forward.4} parent=11 // pred_check
        %p184 = pneg %p59
      $region14: #{stock_transformer_forward.4} parent=11 // pred_check_branch
        %186 = sbr.rel (%p184) target = $region16
      $region15: #{stock_transformer_forward.4} parent=11 // pred_region
        _
      $region16: #{stock_transformer_forward.4} parent=11 // pred_fallthru
        _
      // Predicated region
      $region17: #{stock_transformer_forward.4} parent=11 // pred_check
        %p187 = pneg %p80
      $region18: #{stock_transformer_forward.4} parent=11 // pred_check_branch
        %189 = sbr.rel (%p187) target = $region20
      $region19: #{stock_transformer_forward.4} parent=11 // pred_region
        _
      $region20: #{stock_transformer_forward.4} parent=11 // pred_fallthru
        _
      // Predicated region
      $region21: #{stock_transformer_forward.4} parent=11 // pred_check
        %p190 = pneg %p101
      $region22: #{stock_transformer_forward.4} parent=11 // pred_check_branch
        %192 = sbr.rel (%p190) target = $region24
      $region23: #{stock_transformer_forward.4} parent=11 // pred_region
        _
      $region24: #{stock_transformer_forward.4} parent=11 // pred_fallthru
        _
      // Predicated region
      $region25: #{stock_transformer_forward.4} parent=11 // pred_check
        %p193 = pneg %p122
      $region26: #{stock_transformer_forward.4} parent=11 // pred_check_branch
        %195 = sbr.rel (%p193) target = $region28
      $region27: #{stock_transformer_forward.4} parent=11 // pred_region
        _
      $region28: #{stock_transformer_forward.4} parent=11 // pred_fallthru
        _
      // Predicated region
      $region29: #{stock_transformer_forward.4} parent=11 // pred_check
        %p196 = pneg %p143
      $region30: #{stock_transformer_forward.4} parent=11 // pred_check_branch
        %198 = sbr.rel (%p196) target = $region32
      $region31: #{stock_transformer_forward.4} parent=11 // pred_region
        _
      $region32: #{stock_transformer_forward.4} parent=11 // pred_fallthru
        _
    $region12: #{stock_transformer_forward.4} parent=5 // pred_fallthru
      _
    %p199 = scmp.lt.s32.totalorder %s12, 2
    // Predicated region
    $region33: #{stock_transformer_forward.4} parent=5 // pred_check
      %p200 = pneg %p199
    $region34: #{stock_transformer_forward.4} parent=5 // pred_check_branch
      %202 = sbr.rel (%p200) target = $region36
    $region35: #{stock_transformer_forward.4} parent=5 // pred_region
      // Predicated region
      $region37: #{stock_transformer_forward.4} parent=35 // pred_check
        %p203 = pneg %p32
      $region38: #{stock_transformer_forward.4} parent=35 // pred_check_branch
        %205 = sbr.rel (%p203) target = $region40
      $region39: #{stock_transformer_forward.4} parent=35 // pred_region
        %p206 = scmp.lt.s32.totalorder %s12, 1
        %s207 = scalar_select %p206, %s12, 1
        %s208 = smul.addr %s207, 8
        %s209 = scalar_lea.vmem %s0, %s208
      $region40: #{stock_transformer_forward.4} parent=35 // pred_fallthru
        _
    $region36: #{stock_transformer_forward.4} parent=5 // pred_fallthru
      _
    %p210 = scmp.le.s32.totalorder 1, %s12
    %p211 = scmp.lt.s32.totalorder %s12, 3
    %p212 = pnand %p210, %p211
    %p213 = pneg %p212
    // Predicated region
    $region41: #{stock_transformer_forward.4} parent=5 // pred_check
      _
    $region42: #{stock_transformer_forward.4} parent=5 // pred_check_branch
      %215 = sbr.rel (%p212) target = $region44
    $region43: #{stock_transformer_forward.4} parent=5 // pred_region
      %s216 = ssub.s32 %s12, 1
      %p217 = scmp.lt.s32.totalorder %s17, 1
      %s218 = scalar_select %p217, %s17, 1
      %s219 = smul.addr %s218, 8
      %s220 = scalar_lea.vmem %s0, %s219
      %p221 = pneg %p38
      %p222 = pneg %p35
      %p223 = pneg %p59
      %p224 = pneg %p56
      %p225 = pneg %p80
      %p226 = pneg %p77
      %p227 = pneg %p101
      %p228 = pneg %p98
      %p229 = pneg %p122
      %p230 = pneg %p119
      %p231 = pneg %p143
      %p232 = pneg %p140
      %p233 = pneg %p169
      %p234 = pneg %p166
      %p235 = scmp.lt.s32.totalorder %s17, 1
      %s236 = scalar_select %p235, %s17, 1
      %s237 = smul.addr %s236, 8
      %s238 = scalar_lea.vmem %s6, %s237
      %p239 = scmp.lt.s32.totalorder %s17, 1
      %s240 = scalar_select %p239, %s17, 1
      %s241 = smul.addr %s240, 8
      %s242 = scalar_lea.vmem %s0, %s241
      %p243 = scmp.lt.s32.totalorder %s17, 1
      %s244 = scalar_select %p243, %s17, 1
      %s245 = smul.addr %s244, 8
      %s246 = scalar_lea.vmem %s6, %s245
      %v247 = vld [vmem:[%s242] sm:$0xff]
      %v248 = vld [vmem:[%s1] sm:$0xf]
      %v249 = vld [vmem:[%s2] sm:$0x1]
      %v251 = vlaneseq
      %v252 = vshrl.u32 %v251, 7
      %v253 = vsub.s32 0, %v252
      %v254 = vrot.slane %v249, %v253
      %vm256 = vcmask 31744
      %v258 = vsel %vm256, %v247, 0
      %vm260 = vcmask 1043456
      %v262 = vsel %vm260, %v248, 0
      %264 = vmatprep.subr.mxu0 0.0
      %265 = vmatpush1.msra.mxu0 %v262
      %266 = vmatprep.subr.mxu0 0.0
      %267 = vmatpush1.msra.mxu0 0.0
      %268 = vmatprep.subr.mxu0 0.0
      %269 = vmatpush1.msra.mxu0 0.0
      %270 = vmatprep.subr.mxu0 0.0
      %271 = vmatpush1.msra.mxu0 0.0
      %272 = vmatprep.subr.mxu0 0.0
      %273 = vmatpush1.msra.mxu0 0.0
      %274 = vmatprep.subr.mxu0 0.0
      %275 = vmatpush1.msra.mxu0 0.0
      %276 = vmatprep.subr.mxu0 0.0
      %277 = vmatpush1.msra.mxu0 0.0
      %278 = vmatprep.subr.mxu0 0.0
      %279 = vmatpush1.msra.mxu0 0.0
      %280 = vmatprep.subr.mxu0 0.0
      %281 = vmatpush1.msra.mxu0 0.0
      %282 = vmatprep.subr.mxu0 0.0
      %283 = vmatpush1.msra.mxu0 0.0
      %284 = vmatprep.subr.mxu0 0.0
      %285 = vmatpush1.msra.mxu0 0.0
      %286 = vmatprep.subr.mxu0 0.0
      %287 = vmatpush1.msra.mxu0 0.0
      %288 = vmatprep.subr.mxu0 0.0
      %289 = vmatpush1.msra.mxu0 0.0
      %290 = vmatprep.subr.mxu0 0.0
      %291 = vmatpush1.msra.mxu0 0.0
      %292 = vmatprep.subr.mxu0 0.0
      %293 = vmatpush1.msra.mxu0 0.0
      %294 = vmatprep.subr.mxu0 0.0
      %295 = vmatpush1.msra.mxu0 0.0
      %296 = vmatprep.subr.mxu0 0.0
      %297 = vmatpush1.msra.mxu0 0.0
      %298 = vmatprep.subr.mxu0 0.0
      %299 = vmatpush1.msra.mxu0 0.0
      %300 = vmatprep.subr.mxu0 0.0
      %301 = vmatpush1.msra.mxu0 0.0
      %302 = vmatprep.subr.mxu0 0.0
      %303 = vmatpush1.msra.mxu0 0.0
      %304 = vmatprep.subr.mxu0 0.0
      %305 = vmatpush1.msra.mxu0 0.0
      %306 = vmatprep.subr.mxu0 0.0
      %307 = vmatpush1.msra.mxu0 0.0
      %308 = vmatprep.subr.mxu0 0.0
      %309 = vmatpush1.msra.mxu0 0.0
      %310 = vmatprep.subr.mxu0 0.0
      %311 = vmatpush1.msra.mxu0 0.0
      %312 = vmatprep.subr.mxu0 0.0
      %313 = vmatpush1.msra.mxu0 0.0
      %314 = vmatprep.subr.mxu0 0.0
      %315 = vmatpush1.msra.mxu0 0.0
      %316 = vmatprep.subr.mxu0 0.0
      %317 = vmatpush1.msra.mxu0 0.0
      %318 = vmatprep.subr.mxu0 0.0
      %319 = vmatpush1.msra.mxu0 0.0
      %320 = vmatprep.subr.mxu0 0.0
      %321 = vmatpush1.msra.mxu0 0.0
      %322 = vmatprep.subr.mxu0 0.0
      %323 = vmatpush1.msra.mxu0 0.0
      %324 = vmatprep.subr.mxu0 0.0
      %325 = vmatpush1.msra.mxu0 0.0
      %326 = vmatprep.subr.mxu0 0.0
      %327 = vmatpush1.msra.mxu0 0.0
      %328 = vmatprep.mubr.f32.mxu0 0.0
      %329 = vmatmul.mubr.f32.gmra.mrb[0].mxu0 %v258
      %v330 = vpop.f32.mrb[0].mxu0
      %v331 = vadd.f32 %v254, %v330
      %v332 = vpop.f32.mrb[0].mxu0
      %333 = vdwg.mxu0
      %v334 = vld [vmem:[%s3] sm:$0x1]
      %v336 = vlaneseq
      %v337 = vshrl.u32 %v336, 7
      %v338 = vsub.s32 0, %v337
      %v339 = vrot.slane %v334, %v338
      %v341 = vmul.f32 %v331, %v339
      %v342 = vld [vmem:[%s4] sm:$0x1]
      %v344 = vlaneseq
      %v345 = vshrl.u32 %v344, 7
      %v346 = vsub.s32 0, %v345
      %v347 = vrot.slane %v342, %v346
      %v349 = vadd.f32 %v341, %v347
      %v350 = vld [vmem:[%s5] sm:$0xff]
      %v351 = vadd.f32 %v349, %v350
      %vm352 = vcmask 261120
      %353 = vst.msk [vmem:[%s246] sm:$0xff] %vm352, %v351
      %p354 = scmp.lt.s32.totalorder %s17, 1
      %s355 = scalar_select %p354, %s17, 1
      %s356 = smul.addr %s355, 8
      %s357 = scalar_lea.vmem %s6, %s356
      // Predicated region
      $region45: #{stock_transformer_forward.4} parent=43 // pred_check
        %p358 = pneg %p166
      $region46: #{stock_transformer_forward.4} parent=43 // pred_check_branch
        %360 = sbr.rel (%p358) target = $region48
      $region47: #{stock_transformer_forward.4} parent=43 // pred_region
        _
      $region48: #{stock_transformer_forward.4} parent=43 // pred_fallthru
        _
    $region44: #{stock_transformer_forward.4} parent=5 // pred_fallthru
      _
    %p361 = scmp.le.s32.totalorder 2, %s12
    // Predicated region
    $region49: #{stock_transformer_forward.4} parent=5 // pred_check
      %p362 = pneg %p361
    $region50: #{stock_transformer_forward.4} parent=5 // pred_check_branch
      %364 = sbr.rel (%p362) target = $region52
    $region51: #{stock_transformer_forward.4} parent=5 // pred_region
      %s365 = ssub.s32 %s12, 2
      // Predicated region
      $region53: #{stock_transformer_forward.4} parent=51 // pred_check
        %p366 = pneg %p172
      $region54: #{stock_transformer_forward.4} parent=51 // pred_check_branch
        %368 = sbr.rel (%p366) target = $region56
      $region55: #{stock_transformer_forward.4} parent=51 // pred_region
        %p369 = scmp.lt.s32.totalorder %s18, 1
        %s370 = scalar_select %p369, %s18, 1
        %s371 = smul.addr %s370, 8
        %s372 = scalar_lea.vmem %s6, %s371
      $region56: #{stock_transformer_forward.4} parent=51 // pred_fallthru
        _
    $region52: #{stock_transformer_forward.4} parent=5 // pred_fallthru
      _
  $region6: #{stock_transformer_forward.4} parent=0 // loop_footer
    %s16 = sadd.s32 1, %s12
  $region7: #{stock_transformer_forward.4} parent=0 // loop_footer_branch
    %11 = sbr.rel target = $region3
  $region8: #{stock_transformer_forward.4} parent=0 // loop_exit
    _

// kernel: stock_transformer_forward.7
$region0: #{stock_transformer_forward.7}
  #allocation0 [shape = 'u32[]', space=smem, size = 0x4, offset = 0x4, fixed_abs, tag = 'smem constant byte address 0x4 - core index']
  #allocation1 [shape = 'u32[144,128]{1,0:T(1,128)}', space=vmem, size = 0x12000, scoped, tag = 'internal scratch']
  #allocation2 [shape = 'f32[1,1]{1,0:T(1,128)S(1)}', space=vmem, size = 0x200, scoped, tag = 'scoped memory for stock_transformer_forward.7']
  %s0 = inlined_call_operand.vmem [shape: f32[2,32], index: 0, kind: input, shape index: {}]
  %s1 = inlined_call_operand.vmem [shape: f32[32,16], index: 1, kind: input, shape index: {}]
  %s2 = inlined_call_operand.vmem [shape: f32[1,16], index: 2, kind: input, shape index: {}]
  %s3 = inlined_call_operand.vmem [shape: f32[1,16], index: 3, kind: input, shape index: {}]
  %s4 = inlined_call_operand.vmem [shape: f32[1,16], index: 4, kind: input, shape index: {}]
  %s5 = inlined_call_operand.vmem [shape: f32[1,16], index: 5, kind: input, shape index: {}]
  %s6 = inlined_call_operand.<no memory space> [shape: f32[1,1], index: 6, kind: input, shape index: {}]
  %s7 = inlined_call_operand.vmem [shape: f32[2,1], index: 7, kind: output, shape index: {}]
  %s8 = sld [smem:[#allocation0]]
  $region38: #{stock_transformer_forward.7} parent=0
    _
  %s10 = ssub.s32 1, %s8
  %s11 = scalar_select 0, %s10, %s8
  %v12 = vstv %s6
  %13 = vst [vmem:[#allocation2] sm:$0x1] %v12
  // Predicated region
  $region2: #{stock_transformer_forward.7} parent=0 // pred_check
    _
  $region3: #{stock_transformer_forward.7} parent=0 // pred_check_branch
    %15 = sbr.rel (0) target = $region5
  $region4: #{stock_transformer_forward.7} parent=0 // pred_region
    _
  $region5: #{stock_transformer_forward.7} parent=0 // pred_fallthru
    _
  // Predicated region
  $region6: #{stock_transformer_forward.7} parent=0 // pred_check
    _
  $region7: #{stock_transformer_forward.7} parent=0 // pred_check_branch
    %17 = sbr.rel (0) target = $region9
  $region8: #{stock_transformer_forward.7} parent=0 // pred_region
    _
  $region9: #{stock_transformer_forward.7} parent=0 // pred_fallthru
    _
  // Predicated region
  $region10: #{stock_transformer_forward.7} parent=0 // pred_check
    _
  $region11: #{stock_transformer_forward.7} parent=0 // pred_check_branch
    %19 = sbr.rel (0) target = $region13
  $region12: #{stock_transformer_forward.7} parent=0 // pred_region
    _
  $region13: #{stock_transformer_forward.7} parent=0 // pred_fallthru
    _
  // Predicated region
  $region14: #{stock_transformer_forward.7} parent=0 // pred_check
    _
  $region15: #{stock_transformer_forward.7} parent=0 // pred_check_branch
    %21 = sbr.rel (0) target = $region17
  $region16: #{stock_transformer_forward.7} parent=0 // pred_region
    _
  $region17: #{stock_transformer_forward.7} parent=0 // pred_fallthru
    _
  // Predicated region
  $region18: #{stock_transformer_forward.7} parent=0 // pred_check
    _
  $region19: #{stock_transformer_forward.7} parent=0 // pred_check_branch
    %23 = sbr.rel (0) target = $region21
  $region20: #{stock_transformer_forward.7} parent=0 // pred_region
    _
  $region21: #{stock_transformer_forward.7} parent=0 // pred_fallthru
    _
  // Predicated region
  $region22: #{stock_transformer_forward.7} parent=0 // pred_check
    _
  $region23: #{stock_transformer_forward.7} parent=0 // pred_check_branch
    %25 = sbr.rel (0) target = $region25
  $region24: #{stock_transformer_forward.7} parent=0 // pred_region
    _
  $region25: #{stock_transformer_forward.7} parent=0 // pred_fallthru
    _
  // Predicated region
  $region26: #{stock_transformer_forward.7} parent=0 // pred_check
    _
  $region27: #{stock_transformer_forward.7} parent=0 // pred_check_branch
    %27 = sbr.rel (0) target = $region29
  $region28: #{stock_transformer_forward.7} parent=0 // pred_region
    _
  $region29: #{stock_transformer_forward.7} parent=0 // pred_fallthru
    _
  %v28 = vld [vmem:[%s0] sm:$0x3]
  %v29 = vld [vmem:[%s1] sm:$0xff]
  %v30 = vld [vmem:[%s1 + $0x8] sm:$0xff]
  %v31 = vld [vmem:[%s1 + $0x10] sm:$0xff]
  %v32 = vld [vmem:[%s1 + $0x18] sm:$0xff]
  %v33 = vld [vmem:[%s2] sm:$0x1]
  %v35 = vlaneseq
  %v36 = vshrl.u32 %v35, 7
  %v37 = vsub.s32 0, %v36
  %v38 = vrot.slane %v33, %v37
  %vm40 = vcmask 261120
  %v42 = vsel %vm40, %v28, 0
  %44 = vmatprep.subr.mxu0 0.0
  %45 = vmatpush1.msra.mxu0 %v29
  %46 = vmatprep.subr.mxu0 0.0
  %47 = vmatpush1.msra.mxu0 %v30
  %48 = vmatprep.subr.mxu0 0.0
  %49 = vmatpush1.msra.mxu0 %v31
  %50 = vmatprep.subr.mxu0 0.0
  %51 = vmatpush1.msra.mxu0 %v32
  %52 = vmatprep.subr.mxu0 0.0
  %53 = vmatpush1.msra.mxu0 0.0
  %54 = vmatprep.subr.mxu0 0.0
  %55 = vmatpush1.msra.mxu0 0.0
  %56 = vmatprep.subr.mxu0 0.0
  %57 = vmatpush1.msra.mxu0 0.0
  %58 = vmatprep.subr.mxu0 0.0
  %59 = vmatpush1.msra.mxu0 0.0
  %60 = vmatprep.subr.mxu0 0.0
  %61 = vmatpush1.msra.mxu0 0.0
  %62 = vmatprep.subr.mxu0 0.0
  %63 = vmatpush1.msra.mxu0 0.0
  %64 = vmatprep.subr.mxu0 0.0
  %65 = vmatpush1.msra.mxu0 0.0
  %66 = vmatprep.subr.mxu0 0.0
  %67 = vmatpush1.msra.mxu0 0.0
  %68 = vmatprep.subr.mxu0 0.0
  %69 = vmatpush1.msra.mxu0 0.0
  %70 = vmatprep.subr.mxu0 0.0
  %71 = vmatpush1.msra.mxu0 0.0
  %72 = vmatprep.subr.mxu0 0.0
  %73 = vmatpush1.msra.mxu0 0.0
  %74 = vmatprep.subr.mxu0 0.0
  %75 = vmatpush1.msra.mxu0 0.0
  %76 = vmatprep.subr.mxu0 0.0
  %77 = vmatpush1.msra.mxu0 0.0
  %78 = vmatprep.subr.mxu0 0.0
  %79 = vmatpush1.msra.mxu0 0.0
  %80 = vmatprep.subr.mxu0 0.0
  %81 = vmatpush1.msra.mxu0 0.0
  %82 = vmatprep.subr.mxu0 0.0
  %83 = vmatpush1.msra.mxu0 0.0
  %84 = vmatprep.subr.mxu0 0.0
  %85 = vmatpush1.msra.mxu0 0.0
  %86 = vmatprep.subr.mxu0 0.0
  %87 = vmatpush1.msra.mxu0 0.0
  %88 = vmatprep.subr.mxu0 0.0
  %89 = vmatpush1.msra.mxu0 0.0
  %90 = vmatprep.subr.mxu0 0.0
  %91 = vmatpush1.msra.mxu0 0.0
  %92 = vmatprep.subr.mxu0 0.0
  %93 = vmatpush1.msra.mxu0 0.0
  %94 = vmatprep.subr.mxu0 0.0
  %95 = vmatpush1.msra.mxu0 0.0
  %96 = vmatprep.subr.mxu0 0.0
  %97 = vmatpush1.msra.mxu0 0.0
  %98 = vmatprep.subr.mxu0 0.0
  %99 = vmatpush1.msra.mxu0 0.0
  %100 = vmatprep.subr.mxu0 0.0
  %101 = vmatpush1.msra.mxu0 0.0
  %102 = vmatprep.subr.mxu0 0.0
  %103 = vmatpush1.msra.mxu0 0.0
  %104 = vmatprep.subr.mxu0 0.0
  %105 = vmatpush1.msra.mxu0 0.0
  %106 = vmatprep.subr.mxu0 0.0
  %107 = vmatpush1.msra.mxu0 0.0
  %108 = vmatprep.mubr.f32.mxu0 0.0
  %109 = vmatmul.mubr.f32.gmra.mrb[0].mxu0 %v42
  %v110 = vpop.f32.mrb[0].mxu0
  %v111 = vadd.f32 %v38, %v110
  %v112 = vpop.f32.mrb[0].mxu0
  %113 = vdwg.mxu0
  %v114 = vld [vmem:[%s3] sm:$0x1]
  %v116 = vlaneseq
  %v117 = vshrl.u32 %v116, 7
  %v118 = vsub.s32 0, %v117
  %v119 = vrot.slane %v114, %v118
  %v121 = vmul.f32 %v111, %v119
  %v122 = vld [vmem:[%s4] sm:$0x1]
  %v124 = vlaneseq
  %v125 = vshrl.u32 %v124, 7
  %v126 = vsub.s32 0, %v125
  %v127 = vrot.slane %v122, %v126
  %v129 = vadd.f32 %v121, %v127
  %v130 = vmax.f32 %v129, 0.0
  %v131 = vld [vmem:[%s5] sm:$0x1]
  %v133 = vlaneseq
  %v134 = vshrl.u32 %v133, 7
  %v135 = vsub.s32 0, %v134
  %v136 = vrot.slane %v131, %v135
  %v138 = vmul.f32 %v130, %v136
  %vm139 = vcmask 123904
  %v140 = vsel %vm139, %v138, 0.0
  %141 = vadd.xlane.f32.xlu0 %v140
  %v142 = vpop.xlane.xlu0 %141
  %v143 = vld [vmem:[#allocation2] sm:$0x1]
  %v145 = vlaneseq
  %v146 = vshrl.u32 %v145, 7
  %v147 = vsub.s32 0, %v146
  %v148 = vrot.slane %v143, %v147
  %v150 = vadd.f32 %v142, %v148
  %vm151 = vcmask 1024
  %152 = vst.msk [vmem:[%s7] sm:$0x3] %vm151, %v150
  // Predicated region
  $region30: #{stock_transformer_forward.7} parent=0 // pred_check
    _
  $region31: #{stock_transformer_forward.7} parent=0 // pred_check_branch
    %154 = sbr.rel (0) target = $region33
  $region32: #{stock_transformer_forward.7} parent=0 // pred_region
    _
  $region33: #{stock_transformer_forward.7} parent=0 // pred_fallthru
    _
  // Predicated region
  $region34: #{stock_transformer_forward.7} parent=0 // pred_check
    _
  $region35: #{stock_transformer_forward.7} parent=0 // pred_check_branch
    %156 = sbr.rel (0) target = $region37
  $region36: #{stock_transformer_forward.7} parent=0 // pred_region
    _
  $region37: #{stock_transformer_forward.7} parent=0 // pred_fallthru
    _

// kernel: stock_transformer_forward.5
$region0: #{stock_transformer_forward.5}
  #allocation0 [shape = 'u32[]', space=smem, size = 0x4, offset = 0x4, fixed_abs, tag = 'smem constant byte address 0x4 - core index']
  #allocation1 [shape = 'u32[144,128]{1,0:T(1,128)}', space=vmem, size = 0x12000, scoped, tag = 'internal scratch']
  %s0 = inlined_call_operand.vmem [shape: f32[16,32], index: 0, kind: input, shape index: {}]
  %s1 = inlined_call_operand.vmem [shape: f32[32,96], index: 1, kind: input, shape index: {}]
  %s2 = inlined_call_operand.vmem [shape: f32[1,96], index: 2, kind: input, shape index: {}]
  %s3 = inlined_call_operand.vmem [shape: f32[32,32], index: 3, kind: input, shape index: {}]
  %s4 = inlined_call_operand.vmem [shape: f32[1,32], index: 4, kind: input, shape index: {}]
  %s5 = inlined_call_operand.vmem [shape: f32[1,32], index: 5, kind: input, shape index: {}]
  %s6 = inlined_call_operand.vmem [shape: f32[1,32], index: 6, kind: input, shape index: {}]
  %s7 = inlined_call_operand.vmem [shape: f32[32,64], index: 7, kind: input, shape index: {}]
  %s8 = inlined_call_operand.vmem [shape: f32[1,64], index: 8, kind: input, shape index: {}]
  %s9 = inlined_call_operand.vmem [shape: f32[64,32], index: 9, kind: input, shape index: {}]
  %s10 = inlined_call_operand.vmem [shape: f32[1,32], index: 10, kind: input, shape index: {}]
  %s11 = inlined_call_operand.vmem [shape: f32[1,32], index: 11, kind: input, shape index: {}]
  %s12 = inlined_call_operand.vmem [shape: f32[1,32], index: 12, kind: input, shape index: {}]
  %s13 = inlined_call_operand.vmem [shape: f32[16,32], index: 13, kind: output, shape index: {}]
  %s14 = sld [smem:[#allocation0]]
  $region85: #{stock_transformer_forward.5} parent=0
    _
  %s16 = ssub.s32 1, %s14
  %s17 = scalar_select 0, %s16, %s14
  loop: start=0, step=1, limit=4
  $region2: #{stock_transformer_forward.5} parent=0 // loop_pre_header
    _
  $region3: #{stock_transformer_forward.5} parent=0 // loop_header
    %s19 = sphi 0, %s23
    %p20 = scmp.ge.s32.totalorder %s19, 4
    %s29 = sphi 0, %s31
    %s32 = sphi 0, %s29
    %s33 = sphi 0, %s32
    %s49 = sphi 0, %s33
    %s53 = sphi 0, %s53
    %s55 = sphi 0, %s53
    %s56 = sphi 0, %s55
    %s70 = sphi 0, %s56
    %s74 = sphi 0, %s74
    %s76 = sphi 0, %s74
    %s77 = sphi 0, %s76
    %s91 = sphi 0, %s77
    %s95 = sphi 0, %s95
    %s97 = sphi 0, %s95
    %s98 = sphi 0, %s97
    %s112 = sphi 0, %s98
    %s116 = sphi 0, %s116
    %s118 = sphi 0, %s116
    %s119 = sphi 0, %s118
    %s133 = sphi 0, %s119
    %s137 = sphi 0, %s137
    %s139 = sphi 0, %s137
    %s140 = sphi 0, %s139
    %s154 = sphi 0, %s140
    %s158 = sphi 0, %s158
    %s160 = sphi 0, %s158
    %s161 = sphi 0, %s160
    %s175 = sphi 0, %s161
    %s179 = sphi 0, %s179
    %s181 = sphi 0, %s179
    %s182 = sphi 0, %s181
    %s196 = sphi 0, %s182
    %s200 = sphi 0, %s200
    %s202 = sphi 0, %s200
    %s203 = sphi 0, %s202
    %s217 = sphi 0, %s203
    %s221 = sphi 0, %s221
    %s223 = sphi 0, %s221
    %s224 = sphi 0, %s223
    %s238 = sphi 0, %s224
    %s242 = sphi 0, %s242
    %s244 = sphi 0, %s242
    %s245 = sphi 0, %s244
    %s259 = sphi 0, %s245
    %s263 = sphi 0, %s263
    %s265 = sphi 0, %s263
    %s266 = sphi 0, %s265
    %s280 = sphi 0, %s266
    %s284 = sphi 0, %s284
    %s286 = sphi 0, %s284
    %s287 = sphi 0, %s286
    %s301 = sphi 0, %s287
    %s307 = sphi 0, %s309
    %s310 = sphi 0, %s307
    %s311 = sphi 0, %s310
    %s327 = sphi 0, %s311
  $region4: #{stock_transformer_forward.5} parent=0 // loop_header_branch
    %22 = sbr.rel (%p20) target = $region8
  $region5: #{stock_transformer_forward.5} parent=0 // loop_body
    %s24 = ssub.s32 %s19, 1
    %s25 = ssub.s32 %s19, 2
    %s26 = sadd.s32 %s19, 1
    %s27 = ssub.s32 %s19, %s26
    %p28 = scmp.eq.s32.totalorder %s27, 0
    %s30 = sadd.s32 %s29, 1
    %s31 = scalar_select %p28, %s29, %s30
    %p34 = pneg %p28
    %p35 = scmp.eq.s32.totalorder %s19, 1
    %p36 = por %p34, %p35
    %p37 = scmp.ne.s32.totalorder %s29, %s32
    %p38 = scmp.eq.s32.totalorder %s19, 0
    %p39 = por %p37, %p38
    %p40 = scmp.ne.s32.totalorder %s29, %s32
    %p41 = scmp.eq.s32.totalorder %s24, 1
    %p42 = por %p40, %p41
    %p43 = scmp.ne.s32.totalorder %s32, %s33
    %p44 = scmp.eq.s32.totalorder %s24, 0
    %p45 = por %p43, %p44
    %p46 = scmp.ne.s32.totalorder %s32, %s33
    %p47 = scmp.eq.s32.totalorder %s25, 1
    %p48 = por %p46, %p47
    %p50 = scmp.ne.s32.totalorder %s33, %s49
    %p51 = scmp.eq.s32.totalorder %s25, 0
    %p52 = por %p50, %p51
    %s54 = sadd.s32 %s53, 1
    %p57 = scmp.eq.s32.totalorder %s19, 1
    %p58 = scmp.ne.s32.totalorder %s53, %s55
    %p59 = scmp.eq.s32.totalorder %s19, 0
    %p60 = por %p58, %p59
    %p61 = scmp.ne.s32.totalorder %s53, %s55
    %p62 = scmp.eq.s32.totalorder %s24, 1
    %p63 = por %p61, %p62
    %p64 = scmp.ne.s32.totalorder %s55, %s56
    %p65 = scmp.eq.s32.totalorder %s24, 0
    %p66 = por %p64, %p65
    %p67 = scmp.ne.s32.totalorder %s55, %s56
    %p68 = scmp.eq.s32.totalorder %s25, 1
    %p69 = por %p67, %p68
    %p71 = scmp.ne.s32.totalorder %s56, %s70
    %p72 = scmp.eq.s32.totalorder %s25, 0
    %p73 = por %p71, %p72
    %s75 = sadd.s32 %s74, 1
    %p78 = scmp.eq.s32.totalorder %s19, 1
    %p79 = scmp.ne.s32.totalorder %s74, %s76
    %p80 = scmp.eq.s32.totalorder %s19, 0
    %p81 = por %p79, %p80
    %p82 = scmp.ne.s32.totalorder %s74, %s76
    %p83 = scmp.eq.s32.totalorder %s24, 1
    %p84 = por %p82, %p83
    %p85 = scmp.ne.s32.totalorder %s76, %s77
    %p86 = scmp.eq.s32.totalorder %s24, 0
    %p87 = por %p85, %p86
    %p88 = scmp.ne.s32.totalorder %s76, %s77
    %p89 = scmp.eq.s32.totalorder %s25, 1
    %p90 = por %p88, %p89
    %p92 = scmp.ne.s32.totalorder %s77, %s91
    %p93 = scmp.eq.s32.totalorder %s25, 0
    %p94 = por %p92, %p93
    %s96 = sadd.s32 %s95, 1
    %p99 = scmp.eq.s32.totalorder %s19, 1
    %p100 = scmp.ne.s32.totalorder %s95, %s97
    %p101 = scmp.eq.s32.totalorder %s19, 0
    %p102 = por %p100, %p101
    %p103 = scmp.ne.s32.totalorder %s95, %s97
    %p104 = scmp.eq.s32.totalorder %s24, 1
    %p105 = por %p103, %p104
    %p106 = scmp.ne.s32.totalorder %s97, %s98
    %p107 = scmp.eq.s32.totalorder %s24, 0
    %p108 = por %p106, %p107
    %p109 = scmp.ne.s32.totalorder %s97, %s98
    %p110 = scmp.eq.s32.totalorder %s25, 1
    %p111 = por %p109, %p110
    %p113 = scmp.ne.s32.totalorder %s98, %s112
    %p114 = scmp.eq.s32.totalorder %s25, 0
    %p115 = por %p113, %p114
    %s117 = sadd.s32 %s116, 1
    %p120 = scmp.eq.s32.totalorder %s19, 1
    %p121 = scmp.ne.s32.totalorder %s116, %s118
    %p122 = scmp.eq.s32.totalorder %s19, 0
    %p123 = por %p121, %p122
    %p124 = scmp.ne.s32.totalorder %s116, %s118
    %p125 = scmp.eq.s32.totalorder %s24, 1
    %p126 = por %p124, %p125
    %p127 = scmp.ne.s32.totalorder %s118, %s119
    %p128 = scmp.eq.s32.totalorder %s24, 0
    %p129 = por %p127, %p128
    %p130 = scmp.ne.s32.totalorder %s118, %s119
    %p131 = scmp.eq.s32.totalorder %s25, 1
    %p132 = por %p130, %p131
    %p134 = scmp.ne.s32.totalorder %s119, %s133
    %p135 = scmp.eq.s32.totalorder %s25, 0
    %p136 = por %p134, %p135
    %s138 = sadd.s32 %s137, 1
    %p141 = scmp.eq.s32.totalorder %s19, 1
    %p142 = scmp.ne.s32.totalorder %s137, %s139
    %p143 = scmp.eq.s32.totalorder %s19, 0
    %p144 = por %p142, %p143
    %p145 = scmp.ne.s32.totalorder %s137, %s139
    %p146 = scmp.eq.s32.totalorder %s24, 1
    %p147 = por %p145, %p146
    %p148 = scmp.ne.s32.totalorder %s139, %s140
    %p149 = scmp.eq.s32.totalorder %s24, 0
    %p150 = por %p148, %p149
    %p151 = scmp.ne.s32.totalorder %s139, %s140
    %p152 = scmp.eq.s32.totalorder %s25, 1
    %p153 = por %p151, %p152
    %p155 = scmp.ne.s32.totalorder %s140, %s154
    %p156 = scmp.eq.s32.totalorder %s25, 0
    %p157 = por %p155, %p156
    %s159 = sadd.s32 %s158, 1
    %p162 = scmp.eq.s32.totalorder %s19, 1
    %p163 = scmp.ne.s32.totalorder %s158, %s160
    %p164 = scmp.eq.s32.totalorder %s19, 0
    %p165 = por %p163, %p164
    %p166 = scmp.ne.s32.totalorder %s158, %s160
    %p167 = scmp.eq.s32.totalorder %s24, 1
    %p168 = por %p166, %p167
    %p169 = scmp.ne.s32.totalorder %s160, %s161
    %p170 = scmp.eq.s32.totalorder %s24, 0
    %p171 = por %p169, %p170
    %p172 = scmp.ne.s32.totalorder %s160, %s161
    %p173 = scmp.eq.s32.totalorder %s25, 1
    %p174 = por %p172, %p173
    %p176 = scmp.ne.s32.totalorder %s161, %s175
    %p177 = scmp.eq.s32.totalorder %s25, 0
    %p178 = por %p176, %p177
    %s180 = sadd.s32 %s179, 1
    %p183 = scmp.eq.s32.totalorder %s19, 1
    %p184 = scmp.ne.s32.totalorder %s179, %s181
    %p185 = scmp.eq.s32.totalorder %s19, 0
    %p186 = por %p184, %p185
    %p187 = scmp.ne.s32.totalorder %s179, %s181
    %p188 = scmp.eq.s32.totalorder %s24, 1
    %p189 = por %p187, %p188
    %p190 = scmp.ne.s32.totalorder %s181, %s182
    %p191 = scmp.eq.s32.totalorder %s24, 0
    %p192 = por %p190, %p191
    %p193 = scmp.ne.s32.totalorder %s181, %s182
    %p194 = scmp.eq.s32.totalorder %s25, 1
    %p195 = por %p193, %p194
    %p197 = scmp.ne.s32.totalorder %s182, %s196
    %p198 = scmp.eq.s32.totalorder %s25, 0
    %p199 = por %p197, %p198
    %s201 = sadd.s32 %s200, 1
    %p204 = scmp.eq.s32.totalorder %s19, 1
    %p205 = scmp.ne.s32.totalorder %s200, %s202
    %p206 = scmp.eq.s32.totalorder %s19, 0
    %p207 = por %p205, %p206
    %p208 = scmp.ne.s32.totalorder %s200, %s202
    %p209 = scmp.eq.s32.totalorder %s24, 1
    %p210 = por %p208, %p209
    %p211 = scmp.ne.s32.totalorder %s202, %s203
    %p212 = scmp.eq.s32.totalorder %s24, 0
    %p213 = por %p211, %p212
    %p214 = scmp.ne.s32.totalorder %s202, %s203
    %p215 = scmp.eq.s32.totalorder %s25, 1
    %p216 = por %p214, %p215
    %p218 = scmp.ne.s32.totalorder %s203, %s217
    %p219 = scmp.eq.s32.totalorder %s25, 0
    %p220 = por %p218, %p219
    %s222 = sadd.s32 %s221, 1
    %p225 = scmp.eq.s32.totalorder %s19, 1
    %p226 = scmp.ne.s32.totalorder %s221, %s223
    %p227 = scmp.eq.s32.totalorder %s19, 0
    %p228 = por %p226, %p227
    %p229 = scmp.ne.s32.totalorder %s221, %s223
    %p230 = scmp.eq.s32.totalorder %s24, 1
    %p231 = por %p229, %p230
    %p232 = scmp.ne.s32.totalorder %s223, %s224
    %p233 = scmp.eq.s32.totalorder %s24, 0
    %p234 = por %p232, %p233
    %p235 = scmp.ne.s32.totalorder %s223, %s224
    %p236 = scmp.eq.s32.totalorder %s25, 1
    %p237 = por %p235, %p236
    %p239 = scmp.ne.s32.totalorder %s224, %s238
    %p240 = scmp.eq.s32.totalorder %s25, 0
    %p241 = por %p239, %p240
    %s243 = sadd.s32 %s242, 1
    %p246 = scmp.eq.s32.totalorder %s19, 1
    %p247 = scmp.ne.s32.totalorder %s242, %s244
    %p248 = scmp.eq.s32.totalorder %s19, 0
    %p249 = por %p247, %p248
    %p250 = scmp.ne.s32.totalorder %s242, %s244
    %p251 = scmp.eq.s32.totalorder %s24, 1
    %p252 = por %p250, %p251
    %p253 = scmp.ne.s32.totalorder %s244, %s245
    %p254 = scmp.eq.s32.totalorder %s24, 0
    %p255 = por %p253, %p254
    %p256 = scmp.ne.s32.totalorder %s244, %s245
    %p257 = scmp.eq.s32.totalorder %s25, 1
    %p258 = por %p256, %p257
    %p260 = scmp.ne.s32.totalorder %s245, %s259
    %p261 = scmp.eq.s32.totalorder %s25, 0
    %p262 = por %p260, %p261
    %s264 = sadd.s32 %s263, 1
    %p267 = scmp.eq.s32.totalorder %s19, 1
    %p268 = scmp.ne.s32.totalorder %s263, %s265
    %p269 = scmp.eq.s32.totalorder %s19, 0
    %p270 = por %p268, %p269
    %p271 = scmp.ne.s32.totalorder %s263, %s265
    %p272 = scmp.eq.s32.totalorder %s24, 1
    %p273 = por %p271, %p272
    %p274 = scmp.ne.s32.totalorder %s265, %s266
    %p275 = scmp.eq.s32.totalorder %s24, 0
    %p276 = por %p274, %p275
    %p277 = scmp.ne.s32.totalorder %s265, %s266
    %p278 = scmp.eq.s32.totalorder %s25, 1
    %p279 = por %p277, %p278
    %p281 = scmp.ne.s32.totalorder %s266, %s280
    %p282 = scmp.eq.s32.totalorder %s25, 0
    %p283 = por %p281, %p282
    %s285 = sadd.s32 %s284, 1
    %p288 = scmp.eq.s32.totalorder %s19, 1
    %p289 = scmp.ne.s32.totalorder %s284, %s286
    %p290 = scmp.eq.s32.totalorder %s19, 0
    %p291 = por %p289, %p290
    %p292 = scmp.ne.s32.totalorder %s284, %s286
    %p293 = scmp.eq.s32.totalorder %s24, 1
    %p294 = por %p292, %p293
    %p295 = scmp.ne.s32.totalorder %s286, %s287
    %p296 = scmp.eq.s32.totalorder %s24, 0
    %p297 = por %p295, %p296
    %p298 = scmp.ne.s32.totalorder %s286, %s287
    %p299 = scmp.eq.s32.totalorder %s25, 1
    %p300 = por %p298, %p299
    %p302 = scmp.ne.s32.totalorder %s287, %s301
    %p303 = scmp.eq.s32.totalorder %s25, 0
    %p304 = por %p302, %p303
    %s305 = ssub.s32 %s19, %s26
    %p306 = scmp.eq.s32.totalorder %s305, 0
    %s308 = sadd.s32 %s307, 1
    %s309 = scalar_select %p306, %s307, %s308
    %p312 = pneg %p306
    %p313 = scmp.eq.s32.totalorder %s19, 1
    %p314 = por %p312, %p313
    %p315 = scmp.ne.s32.totalorder %s307, %s310
    %p316 = scmp.eq.s32.totalorder %s19, 0
    %p317 = por %p315, %p316
    %p318 = scmp.ne.s32.totalorder %s307, %s310
    %p319 = scmp.eq.s32.totalorder %s24, 1
    %p320 = por %p318, %p319
    %p321 = scmp.ne.s32.totalorder %s310, %s311
    %p322 = scmp.eq.s32.totalorder %s24, 0
    %p323 = por %p321, %p322
    %p324 = scmp.ne.s32.totalorder %s310, %s311
    %p325 = scmp.eq.s32.totalorder %s25, 1
    %p326 = por %p324, %p325
    %p328 = scmp.ne.s32.totalorder %s311, %s327
    %p329 = scmp.eq.s32.totalorder %s25, 0
    %p330 = por %p328, %p329
    %p331 = scmp.le.s32.totalorder 1, %s19
    %p332 = scmp.lt.s32.totalorder %s19, 3
    %p333 = pnand %p331, %p332
    %p334 = pneg %p333
    // Predicated region
    $region9: #{stock_transformer_forward.5} parent=5 // pred_check
      _
    $region10: #{stock_transformer_forward.5} parent=5 // pred_check_branch
      %336 = sbr.rel (%p333) target = $region12
    $region11: #{stock_transformer_forward.5} parent=5 // pred_region
      %s337 = ssub.s32 %s19, 1
      // Predicated region
      $region13: #{stock_transformer_forward.5} parent=11 // pred_check
        %p338 = pneg %p66
      $region14: #{stock_transformer_forward.5} parent=11 // pred_check_branch
        %340 = sbr.rel (%p338) target = $region16
      $region15: #{stock_transformer_forward.5} parent=11 // pred_region
        _
      $region16: #{stock_transformer_forward.5} parent=11 // pred_fallthru
        _
      // Predicated region
      $region17: #{stock_transformer_forward.5} parent=11 // pred_check
        %p341 = pneg %p87
      $region18: #{stock_transformer_forward.5} parent=11 // pred_check_branch
        %343 = sbr.rel (%p341) target = $region20
      $region19: #{stock_transformer_forward.5} parent=11 // pred_region
        _
      $region20: #{stock_transformer_forward.5} parent=11 // pred_fallthru
        _
      // Predicated region
      $region21: #{stock_transformer_forward.5} parent=11 // pred_check
        %p344 = pneg %p108
      $region22: #{stock_transformer_forward.5} parent=11 // pred_check_branch
        %346 = sbr.rel (%p344) target = $region24
      $region23: #{stock_transformer_forward.5} parent=11 // pred_region
        _
      $region24: #{stock_transformer_forward.5} parent=11 // pred_fallthru
        _
      // Predicated region
      $region25: #{stock_transformer_forward.5} parent=11 // pred_check
        %p347 = pneg %p129
      $region26: #{stock_transformer_forward.5} parent=11 // pred_check_branch
        %349 = sbr.rel (%p347) target = $region28
      $region27: #{stock_transformer_forward.5} parent=11 // pred_region
        _
      $region28: #{stock_transformer_forward.5} parent=11 // pred_fallthru
        _
      // Predicated region
      $region29: #{stock_transformer_forward.5} parent=11 // pred_check
        %p350 = pneg %p150
      $region30: #{stock_transformer_forward.5} parent=11 // pred_check_branch
        %352 = sbr.rel (%p350) target = $region32
      $region31: #{stock_transformer_forward.5} parent=11 // pred_region
        _
      $region32: #{stock_transformer_forward.5} parent=11 // pred_fallthru
        _
      // Predicated region
      $region33: #{stock_transformer_forward.5} parent=11 // pred_check
        %p353 = pneg %p171
      $region34: #{stock_transformer_forward.5} parent=11 // pred_check_branch
        %355 = sbr.rel (%p353) target = $region36
      $region35: #{stock_transformer_forward.5} parent=11 // pred_region
        _
      $region36: #{stock_transformer_forward.5} parent=11 // pred_fallthru
        _
      // Predicated region
      $region37: #{stock_transformer_forward.5} parent=11 // pred_check
        %p356 = pneg %p192
      $region38: #{stock_transformer_forward.5} parent=11 // pred_check_branch
        %358 = sbr.rel (%p356) target = $region40
      $region39: #{stock_transformer_forward.5} parent=11 // pred_region
        _
      $region40: #{stock_transformer_forward.5} parent=11 // pred_fallthru
        _
      // Predicated region
      $region41: #{stock_transformer_forward.5} parent=11 // pred_check
        %p359 = pneg %p213
      $region42: #{stock_transformer_forward.5} parent=11 // pred_check_branch
        %361 = sbr.rel (%p359) target = $region44
      $region43: #{stock_transformer_forward.5} parent=11 // pred_region
        _
      $region44: #{stock_transformer_forward.5} parent=11 // pred_fallthru
        _
      // Predicated region
      $region45: #{stock_transformer_forward.5} parent=11 // pred_check
        %p362 = pneg %p234
      $region46: #{stock_transformer_forward.5} parent=11 // pred_check_branch
        %364 = sbr.rel (%p362) target = $region48
      $region47: #{stock_transformer_forward.5} parent=11 // pred_region
        _
      $region48: #{stock_transformer_forward.5} parent=11 // pred_fallthru
        _
      // Predicated region
      $region49: #{stock_transformer_forward.5} parent=11 // pred_check
        %p365 = pneg %p255
      $region50: #{stock_transformer_forward.5} parent=11 // pred_check_branch
        %367 = sbr.rel (%p365) target = $region52
      $region51: #{stock_transformer_forward.5} parent=11 // pred_region
        _
      $region52: #{stock_transformer_forward.5} parent=11 // pred_fallthru
        _
      // Predicated region
      $region53: #{stock_transformer_forward.5} parent=11 // pred_check
        %p368 = pneg %p276
      $region54: #{stock_transformer_forward.5} parent=11 // pred_check_branch
        %370 = sbr.rel (%p368) target = $region56
      $region55: #{stock_transformer_forward.5} parent=11 // pred_region
        _
      $region56: #{stock_transformer_forward.5} parent=11 // pred_fallthru
        _
      // Predicated region
      $region57: #{stock_transformer_forward.5} parent=11 // pred_check
        %p371 = pneg %p297
      $region58: #{stock_transformer_forward.5} parent=11 // pred_check_branch
        %373 = sbr.rel (%p371) target = $region60
      $region59: #{stock_transformer_forward.5} parent=11 // pred_region
        _
      $region60: #{stock_transformer_forward.5} parent=11 // pred_fallthru
        _
    $region12: #{stock_transformer_forward.5} parent=5 // pred_fallthru
      _
    %p374 = scmp.lt.s32.totalorder %s19, 2
    // Predicated region
    $region61: #{stock_transformer_forward.5} parent=5 // pred_check
      %p375 = pneg %p374
    $region62: #{stock_transformer_forward.5} parent=5 // pred_check_branch
      %377 = sbr.rel (%p375) target = $region64
    $region63: #{stock_transformer_forward.5} parent=5 // pred_region
      // Predicated region
      $region65: #{stock_transformer_forward.5} parent=63 // pred_check
        %p378 = pneg %p39
      $region66: #{stock_transformer_forward.5} parent=63 // pred_check_branch
        %380 = sbr.rel (%p378) target = $region68
      $region67: #{stock_transformer_forward.5} parent=63 // pred_region
        %p381 = scmp.lt.s32.totalorder %s19, 1
        %s382 = scalar_select %p381, %s19, 1
        %s383 = smul.addr %s382, 8
        %s384 = scalar_lea.vmem %s0, %s383
      $region68: #{stock_transformer_forward.5} parent=63 // pred_fallthru
        _
    $region64: #{stock_transformer_forward.5} parent=5 // pred_fallthru
      _
    %p385 = scmp.le.s32.totalorder 1, %s19
    %p386 = scmp.lt.s32.totalorder %s19, 3
    %p387 = pnand %p385, %p386
    %p388 = pneg %p387
    // Predicated region
    $region69: #{stock_transformer_forward.5} parent=5 // pred_check
      _
    $region70: #{stock_transformer_forward.5} parent=5 // pred_check_branch
      %390 = sbr.rel (%p387) target = $region72
    $region71: #{stock_transformer_forward.5} parent=5 // pred_region
      %s391 = ssub.s32 %s19, 1
      %p392 = scmp.lt.s32.totalorder %s24, 1
      %s393 = scalar_select %p392, %s24, 1
      %s394 = smul.addr %s393, 8
      %s395 = scalar_lea.vmem %s0, %s394
      %p396 = pneg %p45
      %p397 = pneg %p42
      %p398 = pneg %p66
      %p399 = pneg %p63
      %p400 = pneg %p87
      %p401 = pneg %p84
      %p402 = pneg %p108
      %p403 = pneg %p105
      %p404 = pneg %p129
      %p405 = pneg %p126
      %p406 = pneg %p150
      %p407 = pneg %p147
      %p408 = pneg %p171
      %p409 = pneg %p168
      %p410 = pneg %p192
      %p411 = pneg %p189
      %p412 = pneg %p213
      %p413 = pneg %p210
      %p414 = pneg %p234
      %p415 = pneg %p231
      %p416 = pneg %p255
      %p417 = pneg %p252
      %p418 = pneg %p276
      %p419 = pneg %p273
      %p420 = pneg %p297
      %p421 = pneg %p294
      %p422 = pneg %p323
      %p423 = pneg %p320
      %p424 = scmp.lt.s32.totalorder %s24, 1
      %s425 = scalar_select %p424, %s24, 1
      %s426 = smul.addr %s425, 8
      %s427 = scalar_lea.vmem %s13, %s426
      %p428 = scmp.lt.s32.totalorder %s24, 1
      %s429 = scalar_select %p428, %s24, 1
      %s430 = smul.addr %s429, 8
      %s431 = scalar_lea.vmem %s0, %s430
      %p432 = scmp.lt.s32.totalorder %s24, 1
      %s433 = scalar_select %p432, %s24, 1
      %s434 = smul.addr %s433, 8
      %s435 = scalar_lea.vmem %s13, %s434
      %v436 = vld [vmem:[%s431] sm:$0xff]
      %v437 = vld [vmem:[%s1] sm:$0xff]
      %v438 = vld [vmem:[%s1 + $0x8] sm:$0xff]
      %v439 = vld [vmem:[%s1 + $0x10] sm:$0xff]
      %v440 = vld [vmem:[%s1 + $0x18] sm:$0xff]
      %v441 = vld [vmem:[%s2] sm:$0x1]
      %v443 = vlaneseq
      %v444 = vshrl.u32 %v443, 7
      %v445 = vsub.s32 0, %v444
      %v446 = vrot.slane %v441, %v445
      %vm448 = vcmask 261120
      %v450 = vsel %vm448, %v436, 0
      %452 = vmatprep.subr.mxu0 0.0
      %453 = vmatpush1.msra.mxu0 %v437
      %454 = vmatprep.subr.mxu0 0.0
      %455 = vmatpush1.msra.mxu0 %v438
      %456 = vmatprep.subr.mxu0 0.0
      %457 = vmatpush1.msra.mxu0 %v439
      %458 = vmatprep.subr.mxu0 0.0
      %459 = vmatpush1.msra.mxu0 %v440
      %460 = vmatprep.subr.mxu0 0.0
      %461 = vmatpush1.msra.mxu0 0.0
      %462 = vmatprep.subr.mxu0 0.0
      %463 = vmatpush1.msra.mxu0 0.0
      %464 = vmatprep.subr.mxu0 0.0
      %465 = vmatpush1.msra.mxu0 0.0
      %466 = vmatprep.subr.mxu0 0.0
      %467 = vmatpush1.msra.mxu0 0.0
      %468 = vmatprep.subr.mxu0 0.0
      %469 = vmatpush1.msra.mxu0 0.0
      %470 = vmatprep.subr.mxu0 0.0
      %471 = vmatpush1.msra.mxu0 0.0
      %472 = vmatprep.subr.mxu0 0.0
      %473 = vmatpush1.msra.mxu0 0.0
      %474 = vmatprep.subr.mxu0 0.0
      %475 = vmatpush1.msra.mxu0 0.0
      %476 = vmatprep.subr.mxu0 0.0
      %477 = vmatpush1.msra.mxu0 0.0
      %478 = vmatprep.subr.mxu0 0.0
      %479 = vmatpush1.msra.mxu0 0.0
      %480 = vmatprep.subr.mxu0 0.0
      %481 = vmatpush1.msra.mxu0 0.0
      %482 = vmatprep.subr.mxu0 0.0
      %483 = vmatpush1.msra.mxu0 0.0
      %484 = vmatprep.subr.mxu0 0.0
      %485 = vmatpush1.msra.mxu0 0.0
      %486 = vmatprep.subr.mxu0 0.0
      %487 = vmatpush1.msra.mxu0 0.0
      %488 = vmatprep.subr.mxu0 0.0
      %489 = vmatpush1.msra.mxu0 0.0
      %490 = vmatprep.subr.mxu0 0.0
      %491 = vmatpush1.msra.mxu0 0.0
      %492 = vmatprep.subr.mxu0 0.0
      %493 = vmatpush1.msra.mxu0 0.0
      %494 = vmatprep.subr.mxu0 0.0
      %495 = vmatpush1.msra.mxu0 0.0
      %496 = vmatprep.subr.mxu0 0.0
      %497 = vmatpush1.msra.mxu0 0.0
      %498 = vmatprep.subr.mxu0 0.0
      %499 = vmatpush1.msra.mxu0 0.0
      %500 = vmatprep.subr.mxu0 0.0
      %501 = vmatpush1.msra.mxu0 0.0
      %502 = vmatprep.subr.mxu0 0.0
      %503 = vmatpush1.msra.mxu0 0.0
      %504 = vmatprep.subr.mxu0 0.0
      %505 = vmatpush1.msra.mxu0 0.0
      %506 = vmatprep.subr.mxu0 0.0
      %507 = vmatpush1.msra.mxu0 0.0
      %508 = vmatprep.subr.mxu0 0.0
      %509 = vmatpush1.msra.mxu0 0.0
      %510 = vmatprep.subr.mxu0 0.0
      %511 = vmatpush1.msra.mxu0 0.0
      %512 = vmatprep.subr.mxu0 0.0
      %513 = vmatpush1.msra.mxu0 0.0
      %514 = vmatprep.subr.mxu0 0.0
      %515 = vmatpush1.msra.mxu0 0.0
      %516 = vmatprep.mubr.f32.mxu0 0.0
      %517 = vmatmul.mubr.f32.gmra.mrb[0].mxu0 %v450
      %v518 = vpop.f32.mrb[0].mxu0
      %v519 = vadd.f32 %v446, %v518
      %v520 = vpop.f32.mrb[0].mxu0
      %521 = vdwg.mxu0
      %523 = vrot.lane.b32.xlu0 %v519, 96
      %v524 = vpop.permute.xlu0 %523
      %vm525 = vcmask 64512
      %v526 = vsel %vm525, %v519, 0
      %v528 = vsel %vm525, %v524, 0
      %530 = vmatprep.subr.mxu0 0.0
      %531 = vmatpush1.xpose.msra.mxu0 %v528
      %532 = vmatprep.subr.mxu0 0.0
      %533 = vmatpush1.xpose.msra.mxu0 0.0
      %534 = vmatprep.subr.mxu0 0.0
      %535 = vmatpush1.xpose.msra.mxu0 0.0
      %536 = vmatprep.subr.mxu0 0.0
      %537 = vmatpush1.xpose.msra.mxu0 0.0
      %538 = vmatprep.subr.mxu0 0.0
      %539 = vmatpush1.xpose.msra.mxu0 0.0
      %540 = vmatprep.subr.mxu0 0.0
      %541 = vmatpush1.xpose.msra.mxu0 0.0
      %542 = vmatprep.subr.mxu0 0.0
      %543 = vmatpush1.xpose.msra.mxu0 0.0
      %544 = vmatprep.subr.mxu0 0.0
      %545 = vmatpush1.xpose.msra.mxu0 0.0
      %546 = vmatprep.subr.mxu0 0.0
      %547 = vmatpush1.xpose.msra.mxu0 0.0
      %548 = vmatprep.subr.mxu0 0.0
      %549 = vmatpush1.xpose.msra.mxu0 0.0
      %550 = vmatprep.subr.mxu0 0.0
      %551 = vmatpush1.xpose.msra.mxu0 0.0
      %552 = vmatprep.subr.mxu0 0.0
      %553 = vmatpush1.xpose.msra.mxu0 0.0
      %554 = vmatprep.subr.mxu0 0.0
      %555 = vmatpush1.xpose.msra.mxu0 0.0
      %556 = vmatprep.subr.mxu0 0.0
      %557 = vmatpush1.xpose.msra.mxu0 0.0
      %558 = vmatprep.subr.mxu0 0.0
      %559 = vmatpush1.xpose.msra.mxu0 0.0
      %560 = vmatprep.subr.mxu0 0.0
      %561 = vmatpush1.xpose.msra.mxu0 0.0
      %562 = vmatprep.subr.mxu0 0.0
      %563 = vmatpush1.xpose.msra.mxu0 0.0
      %564 = vmatprep.subr.mxu0 0.0
      %565 = vmatpush1.xpose.msra.mxu0 0.0
      %566 = vmatprep.subr.mxu0 0.0
      %567 = vmatpush1.xpose.msra.mxu0 0.0
      %568 = vmatprep.subr.mxu0 0.0
      %569 = vmatpush1.xpose.msra.mxu0 0.0
      %570 = vmatprep.subr.mxu0 0.0
      %571 = vmatpush1.xpose.msra.mxu0 0.0
      %572 = vmatprep.subr.mxu0 0.0
      %573 = vmatpush1.xpose.msra.mxu0 0.0
      %574 = vmatprep.subr.mxu0 0.0
      %575 = vmatpush1.xpose.msra.mxu0 0.0
      %576 = vmatprep.subr.mxu0 0.0
      %577 = vmatpush1.xpose.msra.mxu0 0.0
      %578 = vmatprep.subr.mxu0 0.0
      %579 = vmatpush1.xpose.msra.mxu0 0.0
      %580 = vmatprep.subr.mxu0 0.0
      %581 = vmatpush1.xpose.msra.mxu0 0.0
      %582 = vmatprep.subr.mxu0 0.0
      %583 = vmatpush1.xpose.msra.mxu0 0.0
      %584 = vmatprep.subr.mxu0 0.0
      %585 = vmatpush1.xpose.msra.mxu0 0.0
      %586 = vmatprep.subr.mxu0 0.0
      %587 = vmatpush1.xpose.msra.mxu0 0.0
      %588 = vmatprep.subr.mxu0 0.0
      %589 = vmatpush1.xpose.msra.mxu0 0.0
      %590 = vmatprep.subr.mxu0 0.0
      %591 = vmatpush1.xpose.msra.mxu0 0.0
      %592 = vmatprep.subr.mxu0 0.0
      %593 = vmatpush1.xpose.msra.mxu0 0.0
      %594 = vmatprep.mubr.f32.mxu0 0.0
      %595 = vmatmul.mubr.f32.gmra.mrb[0].mxu0 %v526
      %v596 = vpop.f32.mrb[0].mxu0
      %v597 = vadd.f32 0.0, %v596
      %v598 = vpop.f32.mrb[0].mxu0
      %599 = vdwg.mxu0
      %v600 = vmul.f32 %v597, 0.35355338
      %v601 = vsel %vm525, %v600, -inf
      %602 = vmax.xlane.f32.xlu0 %v601
      %v603 = vpop.xlane.xlu0 %602
      %v604 = vsub.f32 %v600, %v603
      %v605 = vmul.f32 %v604, 1.442695
      %v606 = vpow.pop %v605
      %v607 = vsel %vm525, %v606, 0.0
      %608 = vadd.xlane.f32.xlu0 %v607
      %v609 = vpop.xlane.xlu0 %608
      %v610 = vrcp.pop %v609
      %v611 = vmul.f32 %v606, %v610
      %612 = vrot.lane.b32.xlu0 %v519, 64
      %v613 = vpop.permute.xlu0 %612
      %v616 = vsel %vm525, %v611, 0
      %618 = vmatprep.subr.mxu0 0.0
      %619 = vmatpush1.msra.mxu0 %v613
      %620 = vmatprep.subr.mxu0 0.0
      %621 = vmatpush1.msra.mxu0 0.0
      %622 = vmatprep.subr.mxu0 0.0
      %623 = vmatpush1.msra.mxu0 0.0
      %624 = vmatprep.subr.mxu0 0.0
      %625 = vmatpush1.msra.mxu0 0.0
      %626 = vmatprep.subr.mxu0 0.0
      %627 = vmatpush1.msra.mxu0 0.0
      %628 = vmatprep.subr.mxu0 0.0
      %629 = vmatpush1.msra.mxu0 0.0
      %630 = vmatprep.subr.mxu0 0.0
      %631 = vmatpush1.msra.mxu0 0.0
      %632 = vmatprep.subr.mxu0 0.0
      %633 = vmatpush1.msra.mxu0 0.0
      %634 = vmatprep.subr.mxu0 0.0
      %635 = vmatpush1.msra.mxu0 0.0
      %636 = vmatprep.subr.mxu0 0.0
      %637 = vmatpush1.msra.mxu0 0.0
      %638 = vmatprep.subr.mxu0 0.0
      %639 = vmatpush1.msra.mxu0 0.0
      %640 = vmatprep.subr.mxu0 0.0
      %641 = vmatpush1.msra.mxu0 0.0
      %642 = vmatprep.subr.mxu0 0.0
      %643 = vmatpush1.msra.mxu0 0.0
      %644 = vmatprep.subr.mxu0 0.0
      %645 = vmatpush1.msra.mxu0 0.0
      %646 = vmatprep.subr.mxu0 0.0
      %647 = vmatpush1.msra.mxu0 0.0
      %648 = vmatprep.subr.mxu0 0.0
      %649 = vmatpush1.msra.mxu0 0.0
      %650 = vmatprep.subr.mxu0 0.0
      %651 = vmatpush1.msra.mxu0 0.0
      %652 = vmatprep.subr.mxu0 0.0
      %653 = vmatpush1.msra.mxu0 0.0
      %654 = vmatprep.subr.mxu0 0.0
      %655 = vmatpush1.msra.mxu0 0.0
      %656 = vmatprep.subr.mxu0 0.0
      %657 = vmatpush1.msra.mxu0 0.0
      %658 = vmatprep.subr.mxu0 0.0
      %659 = vmatpush1.msra.mxu0 0.0
      %660 = vmatprep.subr.mxu0 0.0
      %661 = vmatpush1.msra.mxu0 0.0
      %662 = vmatprep.subr.mxu0 0.0
      %663 = vmatpush1.msra.mxu0 0.0
      %664 = vmatprep.subr.mxu0 0.0
      %665 = vmatpush1.msra.mxu0 0.0
      %666 = vmatprep.subr.mxu0 0.0
      %667 = vmatpush1.msra.mxu0 0.0
      %668 = vmatprep.subr.mxu0 0.0
      %669 = vmatpush1.msra.mxu0 0.0
      %670 = vmatprep.subr.mxu0 0.0
      %671 = vmatpush1.msra.mxu0 0.0
      %672 = vmatprep.subr.mxu0 0.0
      %673 = vmatpush1.msra.mxu0 0.0
      %674 = vmatprep.subr.mxu0 0.0
      %675 = vmatpush1.msra.mxu0 0.0
      %676 = vmatprep.subr.mxu0 0.0
      %677 = vmatpush1.msra.mxu0 0.0
      %678 = vmatprep.subr.mxu0 0.0
      %679 = vmatpush1.msra.mxu0 0.0
      %680 = vmatprep.subr.mxu0 0.0
      %681 = vmatpush1.msra.mxu0 0.0
      %682 = vmatprep.mubr.f32.mxu0 0.0
      %683 = vmatmul.mubr.f32.gmra.mrb[0].mxu0 %v616
      %v684 = vpop.f32.mrb[0].mxu0
      %v685 = vadd.f32 0.0, %v684
      %v686 = vpop.f32.mrb[0].mxu0
      %687 = vdwg.mxu0
      %688 = vrot.lane.b32.xlu0 %v519, 120
      %v689 = vpop.permute.xlu0 %688
      %690 = vrot.lane.b32.xlu0 %v519, 88
      %v691 = vpop.permute.xlu0 %690
      %v692 = vsel %vm525, %v689, 0
      %v694 = vsel %vm525, %v691, 0
      %696 = vmatprep.subr.mxu0 0.0
      %697 = vmatpush1.xpose.msra.mxu0 %v694
      %698 = vmatprep.subr.mxu0 0.0
      %699 = vmatpush1.xpose.msra.mxu0 0.0
      %700 = vmatprep.subr.mxu0 0.0
      %701 = vmatpush1.xpose.msra.mxu0 0.0
      %702 = vmatprep.subr.mxu0 0.0
      %703 = vmatpush1.xpose.msra.mxu0 0.0
      %704 = vmatprep.subr.mxu0 0.0
      %705 = vmatpush1.xpose.msra.mxu0 0.0
      %706 = vmatprep.subr.mxu0 0.0
      %707 = vmatpush1.xpose.msra.mxu0 0.0
      %708 = vmatprep.subr.mxu0 0.0
      %709 = vmatpush1.xpose.msra.mxu0 0.0
      %710 = vmatprep.subr.mxu0 0.0
      %711 = vmatpush1.xpose.msra.mxu0 0.0
      %712 = vmatprep.subr.mxu0 0.0
      %713 = vmatpush1.xpose.msra.mxu0 0.0
      %714 = vmatprep.subr.mxu0 0.0
      %715 = vmatpush1.xpose.msra.mxu0 0.0
      %716 = vmatprep.subr.mxu0 0.0
      %717 = vmatpush1.xpose.msra.mxu0 0.0
      %718 = vmatprep.subr.mxu0 0.0
      %719 = vmatpush1.xpose.msra.mxu0 0.0
      %720 = vmatprep.subr.mxu0 0.0
      %721 = vmatpush1.xpose.msra.mxu0 0.0
      %722 = vmatprep.subr.mxu0 0.0
      %723 = vmatpush1.xpose.msra.mxu0 0.0
      %724 = vmatprep.subr.mxu0 0.0
      %725 = vmatpush1.xpose.msra.mxu0 0.0
      %726 = vmatprep.subr.mxu0 0.0
      %727 = vmatpush1.xpose.msra.mxu0 0.0
      %728 = vmatprep.subr.mxu0 0.0
      %729 = vmatpush1.xpose.msra.mxu0 0.0
      %730 = vmatprep.subr.mxu0 0.0
      %731 = vmatpush1.xpose.msra.mxu0 0.0
      %732 = vmatprep.subr.mxu0 0.0
      %733 = vmatpush1.xpose.msra.mxu0 0.0
      %734 = vmatprep.subr.mxu0 0.0
      %735 = vmatpush1.xpose.msra.mxu0 0.0
      %736 = vmatprep.subr.mxu0 0.0
      %737 = vmatpush1.xpose.msra.mxu0 0.0
      %738 = vmatprep.subr.mxu0 0.0
      %739 = vmatpush1.xpose.msra.mxu0 0.0
      %740 = vmatprep.subr.mxu0 0.0
      %741 = vmatpush1.xpose.msra.mxu0 0.0
      %742 = vmatprep.subr.mxu0 0.0
      %743 = vmatpush1.xpose.msra.mxu0 0.0
      %744 = vmatprep.subr.mxu0 0.0
      %745 = vmatpush1.xpose.msra.mxu0 0.0
      %746 = vmatprep.subr.mxu0 0.0
      %747 = vmatpush1.xpose.msra.mxu0 0.0
      %748 = vmatprep.subr.mxu0 0.0
      %749 = vmatpush1.xpose.msra.mxu0 0.0
      %750 = vmatprep.subr.mxu0 0.0
      %751 = vmatpush1.xpose.msra.mxu0 0.0
      %752 = vmatprep.subr.mxu0 0.0
      %753 = vmatpush1.xpose.msra.mxu0 0.0
      %754 = vmatprep.subr.mxu0 0.0
      %755 = vmatpush1.xpose.msra.mxu0 0.0
      %756 = vmatprep.subr.mxu0 0.0
      %757 = vmatpush1.xpose.msra.mxu0 0.0
      %758 = vmatprep.subr.mxu0 0.0
      %759 = vmatpush1.xpose.msra.mxu0 0.0
      %760 = vmatprep.mubr.f32.mxu0 0.0
      %761 = vmatmul.mubr.f32.gmra.mrb[0].mxu0 %v692
      %v762 = vpop.f32.mrb[0].mxu0
      %v763 = vadd.f32 0.0, %v762
      %v764 = vpop.f32.mrb[0].mxu0
      %765 = vdwg.mxu0
      %v766 = vmul.f32 %v763, 0.35355338
      %v767 = vsel %vm525, %v766, -inf
      %768 = vmax.xlane.f32.xlu0 %v767
      %v769 = vpop.xlane.xlu0 %768
      %v770 = vsub.f32 %v766, %v769
      %v771 = vmul.f32 %v770, 1.442695
      %v772 = vpow.pop %v771
      %v773 = vsel %vm525, %v772, 0.0
      %774 = vadd.xlane.f32.xlu0 %v773
      %v775 = vpop.xlane.xlu0 %774
      %v776 = vrcp.pop %v775
      %v777 = vmul.f32 %v772, %v776
      %778 = vrot.lane.b32.xlu0 %v519, 56
      %v779 = vpop.permute.xlu0 %778
      %v782 = vsel %vm525, %v777, 0
      %784 = vmatprep.subr.mxu0 0.0
      %785 = vmatpush1.msra.mxu0 %v779
      %786 = vmatprep.subr.mxu0 0.0
      %787 = vmatpush1.msra.mxu0 0.0
      %788 = vmatprep.subr.mxu0 0.0
      %789 = vmatpush1.msra.mxu0 0.0
      %790 = vmatprep.subr.mxu0 0.0
      %791 = vmatpush1.msra.mxu0 0.0
      %792 = vmatprep.subr.mxu0 0.0
      %793 = vmatpush1.msra.mxu0 0.0
      %794 = vmatprep.subr.mxu0 0.0
      %795 = vmatpush1.msra.mxu0 0.0
      %796 = vmatprep.subr.mxu0 0.0
      %797 = vmatpush1.msra.mxu0 0.0
      %798 = vmatprep.subr.mxu0 0.0
      %799 = vmatpush1.msra.mxu0 0.0
      %800 = vmatprep.subr.mxu0 0.0
      %801 = vmatpush1.msra.mxu0 0.0
      %802 = vmatprep.subr.mxu0 0.0
      %803 = vmatpush1.msra.mxu0 0.0
      %804 = vmatprep.subr.mxu0 0.0
      %805 = vmatpush1.msra.mxu0 0.0
      %806 = vmatprep.subr.mxu0 0.0
      %807 = vmatpush1.msra.mxu0 0.0
      %808 = vmatprep.subr.mxu0 0.0
      %809 = vmatpush1.msra.mxu0 0.0
      %810 = vmatprep.subr.mxu0 0.0
      %811 = vmatpush1.msra.mxu0 0.0
      %812 = vmatprep.subr.mxu0 0.0
      %813 = vmatpush1.msra.mxu0 0.0
      %814 = vmatprep.subr.mxu0 0.0
      %815 = vmatpush1.msra.mxu0 0.0
      %816 = vmatprep.subr.mxu0 0.0
      %817 = vmatpush1.msra.mxu0 0.0
      %818 = vmatprep.subr.mxu0 0.0
      %819 = vmatpush1.msra.mxu0 0.0
      %820 = vmatprep.subr.mxu0 0.0
      %821 = vmatpush1.msra.mxu0 0.0
      %822 = vmatprep.subr.mxu0 0.0
      %823 = vmatpush1.msra.mxu0 0.0
      %824 = vmatprep.subr.mxu0 0.0
      %825 = vmatpush1.msra.mxu0 0.0
      %826 = vmatprep.subr.mxu0 0.0
      %827 = vmatpush1.msra.mxu0 0.0
      %828 = vmatprep.subr.mxu0 0.0
      %829 = vmatpush1.msra.mxu0 0.0
      %830 = vmatprep.subr.mxu0 0.0
      %831 = vmatpush1.msra.mxu0 0.0
      %832 = vmatprep.subr.mxu0 0.0
      %833 = vmatpush1.msra.mxu0 0.0
      %834 = vmatprep.subr.mxu0 0.0
      %835 = vmatpush1.msra.mxu0 0.0
      %836 = vmatprep.subr.mxu0 0.0
      %837 = vmatpush1.msra.mxu0 0.0
      %838 = vmatprep.subr.mxu0 0.0
      %839 = vmatpush1.msra.mxu0 0.0
      %840 = vmatprep.subr.mxu0 0.0
      %841 = vmatpush1.msra.mxu0 0.0
      %842 = vmatprep.subr.mxu0 0.0
      %843 = vmatpush1.msra.mxu0 0.0
      %844 = vmatprep.subr.mxu0 0.0
      %845 = vmatpush1.msra.mxu0 0.0
      %846 = vmatprep.subr.mxu0 0.0
      %847 = vmatpush1.msra.mxu0 0.0
      %848 = vmatprep.mubr.f32.mxu0 0.0
      %849 = vmatmul.mubr.f32.gmra.mrb[0].mxu0 %v782
      %v850 = vpop.f32.mrb[0].mxu0
      %v851 = vadd.f32 0.0, %v850
      %v852 = vpop.f32.mrb[0].mxu0
      %853 = vdwg.mxu0
      %854 = vrot.lane.b32.xlu0 %v519, 112
      %v855 = vpop.permute.xlu0 %854
      %856 = vrot.lane.b32.xlu0 %v519, 80
      %v857 = vpop.permute.xlu0 %856
      %v858 = vsel %vm525, %v855, 0
      %v860 = vsel %vm525, %v857, 0
      %862 = vmatprep.subr.mxu0 0.0
      %863 = vmatpush1.xpose.msra.mxu0 %v860
      %864 = vmatprep.subr.mxu0 0.0
      %865 = vmatpush1.xpose.msra.mxu0 0.0
      %866 = vmatprep.subr.mxu0 0.0
      %867 = vmatpush1.xpose.msra.mxu0 0.0
      %868 = vmatprep.subr.mxu0 0.0
      %869 = vmatpush1.xpose.msra.mxu0 0.0
      %870 = vmatprep.subr.mxu0 0.0
      %871 = vmatpush1.xpose.msra.mxu0 0.0
      %872 = vmatprep.subr.mxu0 0.0
      %873 = vmatpush1.xpose.msra.mxu0 0.0
      %874 = vmatprep.subr.mxu0 0.0
      %875 = vmatpush1.xpose.msra.mxu0 0.0
      %876 = vmatprep.subr.mxu0 0.0
      %877 = vmatpush1.xpose.msra.mxu0 0.0
      %878 = vmatprep.subr.mxu0 0.0
      %879 = vmatpush1.xpose.msra.mxu0 0.0
      %880 = vmatprep.subr.mxu0 0.0
      %881 = vmatpush1.xpose.msra.mxu0 0.0
      %882 = vmatprep.subr.mxu0 0.0
      %883 = vmatpush1.xpose.msra.mxu0 0.0
      %884 = vmatprep.subr.mxu0 0.0
      %885 = vmatpush1.xpose.msra.mxu0 0.0
      %886 = vmatprep.subr.mxu0 0.0
      %887 = vmatpush1.xpose.msra.mxu0 0.0
      %888 = vmatprep.subr.mxu0 0.0
      %889 = vmatpush1.xpose.msra.mxu0 0.0
      %890 = vmatprep.subr.mxu0 0.0
      %891 = vmatpush1.xpose.msra.mxu0 0.0
      %892 = vmatprep.subr.mxu0 0.0
      %893 = vmatpush1.xpose.msra.mxu0 0.0
      %894 = vmatprep.subr.mxu0 0.0
      %895 = vmatpush1.xpose.msra.mxu0 0.0
      %896 = vmatprep.subr.mxu0 0.0
      %897 = vmatpush1.xpose.msra.mxu0 0.0
      %898 = vmatprep.subr.mxu0 0.0
      %899 = vmatpush1.xpose.msra.mxu0 0.0
      %900 = vmatprep.subr.mxu0 0.0
      %901 = vmatpush1.xpose.msra.mxu0 0.0
      %902 = vmatprep.subr.mxu0 0.0
      %903 = vmatpush1.xpose.msra.mxu0 0.0
      %904 = vmatprep.subr.mxu0 0.0
      %905 = vmatpush1.xpose.msra.mxu0 0.0
      %906 = vmatprep.subr.mxu0 0.0
      %907 = vmatpush1.xpose.msra.mxu0 0.0
      %908 = vmatprep.subr.mxu0 0.0
      %909 = vmatpush1.xpose.msra.mxu0 0.0
      %910 = vmatprep.subr.mxu0 0.0
      %911 = vmatpush1.xpose.msra.mxu0 0.0
      %912 = vmatprep.subr.mxu0 0.0
      %913 = vmatpush1.xpose.msra.mxu0 0.0
      %914 = vmatprep.subr.mxu0 0.0
      %915 = vmatpush1.xpose.msra.mxu0 0.0
      %916 = vmatprep.subr.mxu0 0.0
      %917 = vmatpush1.xpose.msra.mxu0 0.0
      %918 = vmatprep.subr.mxu0 0.0
      %919 = vmatpush1.xpose.msra.mxu0 0.0
      %920 = vmatprep.subr.mxu0 0.0
      %921 = vmatpush1.xpose.msra.mxu0 0.0
      %922 = vmatprep.subr.mxu0 0.0
      %923 = vmatpush1.xpose.msra.mxu0 0.0
      %924 = vmatprep.subr.mxu0 0.0
      %925 = vmatpush1.xpose.msra.mxu0 0.0
      %926 = vmatprep.mubr.f32.mxu0 0.0
      %927 = vmatmul.mubr.f32.gmra.mrb[0].mxu0 %v858
      %v928 = vpop.f32.mrb[0].mxu0
      %v929 = vadd.f32 0.0, %v928
      %v930 = vpop.f32.mrb[0].mxu0
      %931 = vdwg.mxu0
      %v932 = vmul.f32 %v929, 0.35355338
      %v933 = vsel %vm525, %v932, -inf
      %934 = vmax.xlane.f32.xlu0 %v933
      %v935 = vpop.xlane.xlu0 %934
      %v936 = vsub.f32 %v932, %v935
      %v937 = vmul.f32 %v936, 1.442695
      %v938 = vpow.pop %v937
      %v939 = vsel %vm525, %v938, 0.0
      %940 = vadd.xlane.f32.xlu0 %v939
      %v941 = vpop.xlane.xlu0 %940
      %v942 = vrcp.pop %v941
      %v943 = vmul.f32 %v938, %v942
      %944 = vrot.lane.b32.xlu0 %v519, 48
      %v945 = vpop.permute.xlu0 %944
      %v948 = vsel %vm525, %v943, 0
      %950 = vmatprep.subr.mxu0 0.0
      %951 = vmatpush1.msra.mxu0 %v945
      %952 = vmatprep.subr.mxu0 0.0
      %953 = vmatpush1.msra.mxu0 0.0
      %954 = vmatprep.subr.mxu0 0.0
      %955 = vmatpush1.msra.mxu0 0.0
      %956 = vmatprep.subr.mxu0 0.0
      %957 = vmatpush1.msra.mxu0 0.0
      %958 = vmatprep.subr.mxu0 0.0
      %959 = vmatpush1.msra.mxu0 0.0
      %960 = vmatprep.subr.mxu0 0.0
      %961 = vmatpush1.msra.mxu0 0.0
      %962 = vmatprep.subr.mxu0 0.0
      %963 = vmatpush1.msra.mxu0 0.0
      %964 = vmatprep.subr.mxu0 0.0
      %965 = vmatpush1.msra.mxu0 0.0
      %966 = vmatprep.subr.mxu0 0.0
      %967 = vmatpush1.msra.mxu0 0.0
      %968 = vmatprep.subr.mxu0 0.0
      %969 = vmatpush1.msra.mxu0 0.0
      %970 = vmatprep.subr.mxu0 0.0
      %971 = vmatpush1.msra.mxu0 0.0
      %972 = vmatprep.subr.mxu0 0.0
      %973 = vmatpush1.msra.mxu0 0.0
      %974 = vmatprep.subr.mxu0 0.0
      %975 = vmatpush1.msra.mxu0 0.0
      %976 = vmatprep.subr.mxu0 0.0
      %977 = vmatpush1.msra.mxu0 0.0
      %978 = vmatprep.subr.mxu0 0.0
      %979 = vmatpush1.msra.mxu0 0.0
      %980 = vmatprep.subr.mxu0 0.0
      %981 = vmatpush1.msra.mxu0 0.0
      %982 = vmatprep.subr.mxu0 0.0
      %983 = vmatpush1.msra.mxu0 0.0
      %984 = vmatprep.subr.mxu0 0.0
      %985 = vmatpush1.msra.mxu0 0.0
      %986 = vmatprep.subr.mxu0 0.0
      %987 = vmatpush1.msra.mxu0 0.0
      %988 = vmatprep.subr.mxu0 0.0
      %989 = vmatpush1.msra.mxu0 0.0
      %990 = vmatprep.subr.mxu0 0.0
      %991 = vmatpush1.msra.mxu0 0.0
      %992 = vmatprep.subr.mxu0 0.0
      %993 = vmatpush1.msra.mxu0 0.0
      %994 = vmatprep.subr.mxu0 0.0
      %995 = vmatpush1.msra.mxu0 0.0
      %996 = vmatprep.subr.mxu0 0.0
      %997 = vmatpush1.msra.mxu0 0.0
      %998 = vmatprep.subr.mxu0 0.0
      %999 = vmatpush1.msra.mxu0 0.0
      %1000 = vmatprep.subr.mxu0 0.0
      %1001 = vmatpush1.msra.mxu0 0.0
      %1002 = vmatprep.subr.mxu0 0.0
      %1003 = vmatpush1.msra.mxu0 0.0
      %1004 = vmatprep.subr.mxu0 0.0
      %1005 = vmatpush1.msra.mxu0 0.0
      %1006 = vmatprep.subr.mxu0 0.0
      %1007 = vmatpush1.msra.mxu0 0.0
      %1008 = vmatprep.subr.mxu0 0.0
      %1009 = vmatpush1.msra.mxu0 0.0
      %1010 = vmatprep.subr.mxu0 0.0
      %1011 = vmatpush1.msra.mxu0 0.0
      %1012 = vmatprep.subr.mxu0 0.0
      %1013 = vmatpush1.msra.mxu0 0.0
      %1014 = vmatprep.mubr.f32.mxu0 0.0
      %1015 = vmatmul.mubr.f32.gmra.mrb[0].mxu0 %v948
      %v1016 = vpop.f32.mrb[0].mxu0
      %v1017 = vadd.f32 0.0, %v1016
      %v1018 = vpop.f32.mrb[0].mxu0
      %1019 = vdwg.mxu0
      %1020 = vrot.lane.b32.xlu0 %v519, 104
      %v1021 = vpop.permute.xlu0 %1020
      %1022 = vrot.lane.b32.xlu0 %v519, 72
      %v1023 = vpop.permute.xlu0 %1022
      %v1024 = vsel %vm525, %v1021, 0
      %v1026 = vsel %vm525, %v1023, 0
      %1028 = vmatprep.subr.mxu0 0.0
      %1029 = vmatpush1.xpose.msra.mxu0 %v1026
      %1030 = vmatprep.subr.mxu0 0.0
      %1031 = vmatpush1.xpose.msra.mxu0 0.0
      %1032 = vmatprep.subr.mxu0 0.0
      %1033 = vmatpush1.xpose.msra.mxu0 0.0
      %1034 = vmatprep.subr.mxu0 0.0
      %1035 = vmatpush1.xpose.msra.mxu0 0.0
      %1036 = vmatprep.subr.mxu0 0.0
      %1037 = vmatpush1.xpose.msra.mxu0 0.0
      %1038 = vmatprep.subr.mxu0 0.0
      %1039 = vmatpush1.xpose.msra.mxu0 0.0
      %1040 = vmatprep.subr.mxu0 0.0
      %1041 = vmatpush1.xpose.msra.mxu0 0.0
      %1042 = vmatprep.subr.mxu0 0.0
      %1043 = vmatpush1.xpose.msra.mxu0 0.0
      %1044 = vmatprep.subr.mxu0 0.0
      %1045 = vmatpush1.xpose.msra.mxu0 0.0
      %1046 = vmatprep.subr.mxu0 0.0
      %1047 = vmatpush1.xpose.msra.mxu0 0.0
      %1048 = vmatprep.subr.mxu0 0.0
      %1049 = vmatpush1.xpose.msra.mxu0 0.0
      %1050 = vmatprep.subr.mxu0 0.0
      %1051 = vmatpush1.xpose.msra.mxu0 0.0
      %1052 = vmatprep.subr.mxu0 0.0
      %1053 = vmatpush1.xpose.msra.mxu0 0.0
      %1054 = vmatprep.subr.mxu0 0.0
      %1055 = vmatpush1.xpose.msra.mxu0 0.0
      %1056 = vmatprep.subr.mxu0 0.0
      %1057 = vmatpush1.xpose.msra.mxu0 0.0
      %1058 = vmatprep.subr.mxu0 0.0
      %1059 = vmatpush1.xpose.msra.mxu0 0.0
      %1060 = vmatprep.subr.mxu0 0.0
      %1061 = vmatpush1.xpose.msra.mxu0 0.0
      %1062 = vmatprep.subr.mxu0 0.0
      %1063 = vmatpush1.xpose.msra.mxu0 0.0
      %1064 = vmatprep.subr.mxu0 0.0
      %1065 = vmatpush1.xpose.msra.mxu0 0.0
      %1066 = vmatprep.subr.mxu0 0.0
      %1067 = vmatpush1.xpose.msra.mxu0 0.0
      %1068 = vmatprep.subr.mxu0 0.0
      %1069 = vmatpush1.xpose.msra.mxu0 0.0
      %1070 = vmatprep.subr.mxu0 0.0
      %1071 = vmatpush1.xpose.msra.mxu0 0.0
      %1072 = vmatprep.subr.mxu0 0.0
      %1073 = vmatpush1.xpose.msra.mxu0 0.0
      %1074 = vmatprep.subr.mxu0 0.0
      %1075 = vmatpush1.xpose.msra.mxu0 0.0
      %1076 = vmatprep.subr.mxu0 0.0
      %1077 = vmatpush1.xpose.msra.mxu0 0.0
      %1078 = vmatprep.subr.mxu0 0.0
      %1079 = vmatpush1.xpose.msra.mxu0 0.0
      %1080 = vmatprep.subr.mxu0 0.0
      %1081 = vmatpush1.xpose.msra.mxu0 0.0
      %1082 = vmatprep.subr.mxu0 0.0
      %1083 = vmatpush1.xpose.msra.mxu0 0.0
      %1084 = vmatprep.subr.mxu0 0.0
      %1085 = vmatpush1.xpose.msra.mxu0 0.0
      %1086 = vmatprep.subr.mxu0 0.0
      %1087 = vmatpush1.xpose.msra.mxu0 0.0
      %1088 = vmatprep.subr.mxu0 0.0
      %1089 = vmatpush1.xpose.msra.mxu0 0.0
      %1090 = vmatprep.subr.mxu0 0.0
      %1091 = vmatpush1.xpose.msra.mxu0 0.0
      %1092 = vmatprep.mubr.f32.mxu0 0.0
      %1093 = vmatmul.mubr.f32.gmra.mrb[0].mxu0 %v1024
      %v1094 = vpop.f32.mrb[0].mxu0
      %v1095 = vadd.f32 0.0, %v1094
      %v1096 = vpop.f32.mrb[0].mxu0
      %1097 = vdwg.mxu0
      %v1098 = vmul.f32 %v1095, 0.35355338
      %v1099 = vsel %vm525, %v1098, -inf
      %1100 = vmax.xlane.f32.xlu0 %v1099
      %v1101 = vpop.xlane.xlu0 %1100
      %v1102 = vsub.f32 %v1098, %v1101
      %v1103 = vmul.f32 %v1102, 1.442695
      %v1104 = vpow.pop %v1103
      %v1105 = vsel %vm525, %v1104, 0.0
      %1106 = vadd.xlane.f32.xlu0 %v1105
      %v1107 = vpop.xlane.xlu0 %1106
      %v1108 = vrcp.pop %v1107
      %v1109 = vmul.f32 %v1104, %v1108
      %1110 = vrot.lane.b32.xlu0 %v519, 40
      %v1111 = vpop.permute.xlu0 %1110
      %v1114 = vsel %vm525, %v1109, 0
      %1116 = vmatprep.subr.mxu0 0.0
      %1117 = vmatpush1.msra.mxu0 %v1111
      %1118 = vmatprep.subr.mxu0 0.0
      %1119 = vmatpush1.msra.mxu0 0.0
      %1120 = vmatprep.subr.mxu0 0.0
      %1121 = vmatpush1.msra.mxu0 0.0
      %1122 = vmatprep.subr.mxu0 0.0
      %1123 = vmatpush1.msra.mxu0 0.0
      %1124 = vmatprep.subr.mxu0 0.0
      %1125 = vmatpush1.msra.mxu0 0.0
      %1126 = vmatprep.subr.mxu0 0.0
      %1127 = vmatpush1.msra.mxu0 0.0
      %1128 = vmatprep.subr.mxu0 0.0
      %1129 = vmatpush1.msra.mxu0 0.0
      %1130 = vmatprep.subr.mxu0 0.0
      %1131 = vmatpush1.msra.mxu0 0.0
      %1132 = vmatprep.subr.mxu0 0.0
      %1133 = vmatpush1.msra.mxu0 0.0
      %1134 = vmatprep.subr.mxu0 0.0
      %1135 = vmatpush1.msra.mxu0 0.0
      %1136 = vmatprep.subr.mxu0 0.0
      %1137 = vmatpush1.msra.mxu0 0.0
      %1138 = vmatprep.subr.mxu0 0.0
      %1139 = vmatpush1.msra.mxu0 0.0
      %1140 = vmatprep.subr.mxu0 0.0
      %1141 = vmatpush1.msra.mxu0 0.0
      %1142 = vmatprep.subr.mxu0 0.0
      %1143 = vmatpush1.msra.mxu0 0.0
      %1144 = vmatprep.subr.mxu0 0.0
      %1145 = vmatpush1.msra.mxu0 0.0
      %1146 = vmatprep.subr.mxu0 0.0
      %1147 = vmatpush1.msra.mxu0 0.0
      %1148 = vmatprep.subr.mxu0 0.0
      %1149 = vmatpush1.msra.mxu0 0.0
      %1150 = vmatprep.subr.mxu0 0.0
      %1151 = vmatpush1.msra.mxu0 0.0
      %1152 = vmatprep.subr.mxu0 0.0
      %1153 = vmatpush1.msra.mxu0 0.0
      %1154 = vmatprep.subr.mxu0 0.0
      %1155 = vmatpush1.msra.mxu0 0.0
      %1156 = vmatprep.subr.mxu0 0.0
      %1157 = vmatpush1.msra.mxu0 0.0
      %1158 = vmatprep.subr.mxu0 0.0
      %1159 = vmatpush1.msra.mxu0 0.0
      %1160 = vmatprep.subr.mxu0 0.0
      %1161 = vmatpush1.msra.mxu0 0.0
      %1162 = vmatprep.subr.mxu0 0.0
      %1163 = vmatpush1.msra.mxu0 0.0
      %1164 = vmatprep.subr.mxu0 0.0
      %1165 = vmatpush1.msra.mxu0 0.0
      %1166 = vmatprep.subr.mxu0 0.0
      %1167 = vmatpush1.msra.mxu0 0.0
      %1168 = vmatprep.subr.mxu0 0.0
      %1169 = vmatpush1.msra.mxu0 0.0
      %1170 = vmatprep.subr.mxu0 0.0
      %1171 = vmatpush1.msra.mxu0 0.0
      %1172 = vmatprep.subr.mxu0 0.0
      %1173 = vmatpush1.msra.mxu0 0.0
      %1174 = vmatprep.subr.mxu0 0.0
      %1175 = vmatpush1.msra.mxu0 0.0
      %1176 = vmatprep.subr.mxu0 0.0
      %1177 = vmatpush1.msra.mxu0 0.0
      %1178 = vmatprep.subr.mxu0 0.0
      %1179 = vmatpush1.msra.mxu0 0.0
      %1180 = vmatprep.mubr.f32.mxu0 0.0
      %1181 = vmatmul.mubr.f32.gmra.mrb[0].mxu0 %v1114
      %v1182 = vpop.f32.mrb[0].mxu0
      %v1183 = vadd.f32 0.0, %v1182
      %v1184 = vpop.f32.mrb[0].mxu0
      %1185 = vdwg.mxu0
      %1187 = vrot.lane.b32.xlu0 %v851, 8
      %v1188 = vpop.permute.xlu0 %1187
      %1191 = vrot.lane.b32.xlu0 %v1017, 16
      %v1192 = vpop.permute.xlu0 %1191
      %1195 = vrot.lane.b32.xlu0 %v1183, 24
      %v1196 = vpop.permute.xlu0 %1195
      %v1198 = vsel %vm525, %v685, %v1188
      %vm1199 = vcmask 130048
      %v1200 = vsel %vm1199, %v1198, %v1192
      %vm1201 = vcmask 195584
      %v1202 = vsel %vm1201, %v1200, %v1196
      %v1203 = vld [vmem:[%s3] sm:$0xff]
      %v1204 = vld [vmem:[%s3 + $0x8] sm:$0xff]
      %v1205 = vld [vmem:[%s3 + $0x10] sm:$0xff]
      %v1206 = vld [vmem:[%s3 + $0x18] sm:$0xff]
      %v1208 = vsel %vm448, %v1202, 0
      %1210 = vmatprep.subr.mxu0 0.0
      %1211 = vmatpush1.msra.mxu0 %v1203
      %1212 = vmatprep.subr.mxu0 0.0
      %1213 = vmatpush1.msra.mxu0 %v1204
      %1214 = vmatprep.subr.mxu0 0.0
      %1215 = vmatpush1.msra.mxu0 %v1205
      %1216 = vmatprep.subr.mxu0 0.0
      %1217 = vmatpush1.msra.mxu0 %v1206
      %1218 = vmatprep.subr.mxu0 0.0
      %1219 = vmatpush1.msra.mxu0 0.0
      %1220 = vmatprep.subr.mxu0 0.0
      %1221 = vmatpush1.msra.mxu0 0.0
      %1222 = vmatprep.subr.mxu0 0.0
      %1223 = vmatpush1.msra.mxu0 0.0
      %1224 = vmatprep.subr.mxu0 0.0
      %1225 = vmatpush1.msra.mxu0 0.0
      %1226 = vmatprep.subr.mxu0 0.0
      %1227 = vmatpush1.msra.mxu0 0.0
      %1228 = vmatprep.subr.mxu0 0.0
      %1229 = vmatpush1.msra.mxu0 0.0
      %1230 = vmatprep.subr.mxu0 0.0
      %1231 = vmatpush1.msra.mxu0 0.0
      %1232 = vmatprep.subr.mxu0 0.0
      %1233 = vmatpush1.msra.mxu0 0.0
      %1234 = vmatprep.subr.mxu0 0.0
      %1235 = vmatpush1.msra.mxu0 0.0
      %1236 = vmatprep.subr.mxu0 0.0
      %1237 = vmatpush1.msra.mxu0 0.0
      %1238 = vmatprep.subr.mxu0 0.0
      %1239 = vmatpush1.msra.mxu0 0.0
      %1240 = vmatprep.subr.mxu0 0.0
      %1241 = vmatpush1.msra.mxu0 0.0
      %1242 = vmatprep.subr.mxu0 0.0
      %1243 = vmatpush1.msra.mxu0 0.0
      %1244 = vmatprep.subr.mxu0 0.0
      %1245 = vmatpush1.msra.mxu0 0.0
      %1246 = vmatprep.subr.mxu0 0.0
      %1247 = vmatpush1.msra.mxu0 0.0
      %1248 = vmatprep.subr.mxu0 0.0
      %1249 = vmatpush1.msra.mxu0 0.0
      %1250 = vmatprep.subr.mxu0 0.0
      %1251 = vmatpush1.msra.mxu0 0.0
      %1252 = vmatprep.subr.mxu0 0.0
      %1253 = vmatpush1.msra.mxu0 0.0
      %1254 = vmatprep.subr.mxu0 0.0
      %1255 = vmatpush1.msra.mxu0 0.0
      %1256 = vmatprep.subr.mxu0 0.0
      %1257 = vmatpush1.msra.mxu0 0.0
      %1258 = vmatprep.subr.mxu0 0.0
      %1259 = vmatpush1.msra.mxu0 0.0
      %1260 = vmatprep.subr.mxu0 0.0
      %1261 = vmatpush1.msra.mxu0 0.0
      %1262 = vmatprep.subr.mxu0 0.0
      %1263 = vmatpush1.msra.mxu0 0.0
      %1264 = vmatprep.subr.mxu0 0.0
      %1265 = vmatpush1.msra.mxu0 0.0
      %1266 = vmatprep.subr.mxu0 0.0
      %1267 = vmatpush1.msra.mxu0 0.0
      %1268 = vmatprep.subr.mxu0 0.0
      %1269 = vmatpush1.msra.mxu0 0.0
      %1270 = vmatprep.subr.mxu0 0.0
      %1271 = vmatpush1.msra.mxu0 0.0
      %1272 = vmatprep.subr.mxu0 0.0
      %1273 = vmatpush1.msra.mxu0 0.0
      %1274 = vmatprep.mubr.f32.mxu0 0.0
      %1275 = vmatmul.mubr.f32.gmra.mrb[0].mxu0 %v1208
      %v1276 = vpop.f32.mrb[0].mxu0
      %v1277 = vadd.f32 0.0, %v1276
      %v1278 = vpop.f32.mrb[0].mxu0
      %1279 = vdwg.mxu0
      %v1280 = vadd.f32 %v436, %v1277
      %v1281 = vld [vmem:[%s4] sm:$0x1]
      %v1283 = vlaneseq
      %v1284 = vshrl.u32 %v1283, 7
      %v1285 = vsub.s32 0, %v1284
      %v1286 = vrot.slane %v1281, %v1285
      %v1288 = vadd.f32 %v1280, %v1286
      %v1289 = vsel %vm448, %v1288, 0.0
      %1290 = vadd.xlane.f32.xlu0 %v1289
      %v1291 = vpop.xlane.xlu0 %1290
      %v1292 = vrcp.pop 32.0
      %v1293 = vmul.f32 %v1291, %v1292
      %v1294 = vsub.f32 %v1288, %v1293
      %v1295 = vmul.f32 %v1294, %v1294
      %v1296 = vsel %vm448, %v1295, 0.0
      %1297 = vadd.xlane.f32.xlu0 %v1296
      %v1298 = vpop.xlane.xlu0 %1297
      %v1299 = vmul.f32 %v1298, %v1292
      %v1300 = vadd.f32 %v1299, 1e-05
      %v1301 = vrsqrt.pop %v1300
      %v1302 = vmul.f32 %v1294, %v1301
      %v1303 = vld [vmem:[%s5] sm:$0x1]
      %v1305 = vlaneseq
      %v1306 = vshrl.u32 %v1305, 7
      %v1307 = vsub.s32 0, %v1306
      %v1308 = vrot.slane %v1303, %v1307
      %v1310 = vmul.f32 %v1302, %v1308
      %v1311 = vld [vmem:[%s6] sm:$0x1]
      %v1313 = vlaneseq
      %v1314 = vshrl.u32 %v1313, 7
      %v1315 = vsub.s32 0, %v1314
      %v1316 = vrot.slane %v1311, %v1315
      %v1318 = vadd.f32 %v1310, %v1316
      %v1319 = vld [vmem:[%s7] sm:$0xff]
      %v1320 = vld [vmem:[%s7 + $0x8] sm:$0xff]
      %v1321 = vld [vmem:[%s7 + $0x10] sm:$0xff]
      %v1322 = vld [vmem:[%s7 + $0x18] sm:$0xff]
      %v1323 = vld [vmem:[%s8] sm:$0x1]
      %v1325 = vlaneseq
      %v1326 = vshrl.u32 %v1325, 7
      %v1327 = vsub.s32 0, %v1326
      %v1328 = vrot.slane %v1323, %v1327
      %v1331 = vsel %vm448, %v1318, 0
      %1333 = vmatprep.subr.mxu0 0.0
      %1334 = vmatpush1.msra.mxu0 %v1319
      %1335 = vmatprep.subr.mxu0 0.0
      %1336 = vmatpush1.msra.mxu0 %v1320
      %1337 = vmatprep.subr.mxu0 0.0
      %1338 = vmatpush1.msra.mxu0 %v1321
      %1339 = vmatprep.subr.mxu0 0.0
      %1340 = vmatpush1.msra.mxu0 %v1322
      %1341 = vmatprep.subr.mxu0 0.0
      %1342 = vmatpush1.msra.mxu0 0.0
      %1343 = vmatprep.subr.mxu0 0.0
      %1344 = vmatpush1.msra.mxu0 0.0
      %1345 = vmatprep.subr.mxu0 0.0
      %1346 = vmatpush1.msra.mxu0 0.0
      %1347 = vmatprep.subr.mxu0 0.0
      %1348 = vmatpush1.msra.mxu0 0.0
      %1349 = vmatprep.subr.mxu0 0.0
      %1350 = vmatpush1.msra.mxu0 0.0
      %1351 = vmatprep.subr.mxu0 0.0
      %1352 = vmatpush1.msra.mxu0 0.0
      %1353 = vmatprep.subr.mxu0 0.0
      %1354 = vmatpush1.msra.mxu0 0.0
      %1355 = vmatprep.subr.mxu0 0.0
      %1356 = vmatpush1.msra.mxu0 0.0
      %1357 = vmatprep.subr.mxu0 0.0
      %1358 = vmatpush1.msra.mxu0 0.0
      %1359 = vmatprep.subr.mxu0 0.0
      %1360 = vmatpush1.msra.mxu0 0.0
      %1361 = vmatprep.subr.mxu0 0.0
      %1362 = vmatpush1.msra.mxu0 0.0
      %1363 = vmatprep.subr.mxu0 0.0
      %1364 = vmatpush1.msra.mxu0 0.0
      %1365 = vmatprep.subr.mxu0 0.0
      %1366 = vmatpush1.msra.mxu0 0.0
      %1367 = vmatprep.subr.mxu0 0.0
      %1368 = vmatpush1.msra.mxu0 0.0
      %1369 = vmatprep.subr.mxu0 0.0
      %1370 = vmatpush1.msra.mxu0 0.0
      %1371 = vmatprep.subr.mxu0 0.0
      %1372 = vmatpush1.msra.mxu0 0.0
      %1373 = vmatprep.subr.mxu0 0.0
      %1374 = vmatpush1.msra.mxu0 0.0
      %1375 = vmatprep.subr.mxu0 0.0
      %1376 = vmatpush1.msra.mxu0 0.0
      %1377 = vmatprep.subr.mxu0 0.0
      %1378 = vmatpush1.msra.mxu0 0.0
      %1379 = vmatprep.subr.mxu0 0.0
      %1380 = vmatpush1.msra.mxu0 0.0
      %1381 = vmatprep.subr.mxu0 0.0
      %1382 = vmatpush1.msra.mxu0 0.0
      %1383 = vmatprep.subr.mxu0 0.0
      %1384 = vmatpush1.msra.mxu0 0.0
      %1385 = vmatprep.subr.mxu0 0.0
      %1386 = vmatpush1.msra.mxu0 0.0
      %1387 = vmatprep.subr.mxu0 0.0
      %1388 = vmatpush1.msra.mxu0 0.0
      %1389 = vmatprep.subr.mxu0 0.0
      %1390 = vmatpush1.msra.mxu0 0.0
      %1391 = vmatprep.subr.mxu0 0.0
      %1392 = vmatpush1.msra.mxu0 0.0
      %1393 = vmatprep.subr.mxu0 0.0
      %1394 = vmatpush1.msra.mxu0 0.0
      %1395 = vmatprep.subr.mxu0 0.0
      %1396 = vmatpush1.msra.mxu0 0.0
      %1397 = vmatprep.mubr.f32.mxu0 0.0
      %1398 = vmatmul.mubr.f32.gmra.mrb[0].mxu0 %v1331
      %v1399 = vpop.f32.mrb[0].mxu0
      %v1400 = vadd.f32 %v1328, %v1399
      %v1401 = vpop.f32.mrb[0].mxu0
      %1402 = vdwg.mxu0
      %v1403 = vmax.f32 %v1400, 0.0
      %v1404 = vld [vmem:[%s9] sm:$0xff]
      %v1405 = vld [vmem:[%s9 + $0x8] sm:$0xff]
      %v1406 = vld [vmem:[%s9 + $0x10] sm:$0xff]
      %v1407 = vld [vmem:[%s9 + $0x18] sm:$0xff]
      %v1408 = vld [vmem:[%s9 + $0x20] sm:$0xff]
      %v1409 = vld [vmem:[%s9 + $0x28] sm:$0xff]
      %v1410 = vld [vmem:[%s9 + $0x30] sm:$0xff]
      %v1411 = vld [vmem:[%s9 + $0x38] sm:$0xff]
      %v1412 = vld [vmem:[%s10] sm:$0x1]
      %v1414 = vlaneseq
      %v1415 = vshrl.u32 %v1414, 7
      %v1416 = vsub.s32 0, %v1415
      %v1417 = vrot.slane %v1412, %v1416
      %vm1419 = vcmask 523264
      %v1421 = vsel %vm1419, %v1403, 0
      %1423 = vmatprep.subr.mxu0 0.0
      %1424 = vmatpush1.msra.mxu0 %v1404
      %1425 = vmatprep.subr.mxu0 0.0
      %1426 = vmatpush1.msra.mxu0 %v1405
      %1427 = vmatprep.subr.mxu0 0.0
      %1428 = vmatpush1.msra.mxu0 %v1406
      %1429 = vmatprep.subr.mxu0 0.0
      %1430 = vmatpush1.msra.mxu0 %v1407
      %1431 = vmatprep.subr.mxu0 0.0
      %1432 = vmatpush1.msra.mxu0 %v1408
      %1433 = vmatprep.subr.mxu0 0.0
      %1434 = vmatpush1.msra.mxu0 %v1409
      %1435 = vmatprep.subr.mxu0 0.0
      %1436 = vmatpush1.msra.mxu0 %v1410
      %1437 = vmatprep.subr.mxu0 0.0
      %1438 = vmatpush1.msra.mxu0 %v1411
      %1439 = vmatprep.subr.mxu0 0.0
      %1440 = vmatpush1.msra.mxu0 0.0
      %1441 = vmatprep.subr.mxu0 0.0
      %1442 = vmatpush1.msra.mxu0 0.0
      %1443 = vmatprep.subr.mxu0 0.0
      %1444 = vmatpush1.msra.mxu0 0.0
      %1445 = vmatprep.subr.mxu0 0.0
      %1446 = vmatpush1.msra.mxu0 0.0
      %1447 = vmatprep.subr.mxu0 0.0
      %1448 = vmatpush1.msra.mxu0 0.0
      %1449 = vmatprep.subr.mxu0 0.0
      %1450 = vmatpush1.msra.mxu0 0.0
      %1451 = vmatprep.subr.mxu0 0.0
      %1452 = vmatpush1.msra.mxu0 0.0
      %1453 = vmatprep.subr.mxu0 0.0
      %1454 = vmatpush1.msra.mxu0 0.0
      %1455 = vmatprep.subr.mxu0 0.0
      %1456 = vmatpush1.msra.mxu0 0.0
      %1457 = vmatprep.subr.mxu0 0.0
      %1458 = vmatpush1.msra.mxu0 0.0
      %1459 = vmatprep.subr.mxu0 0.0
      %1460 = vmatpush1.msra.mxu0 0.0
      %1461 = vmatprep.subr.mxu0 0.0
      %1462 = vmatpush1.msra.mxu0 0.0
      %1463 = vmatprep.subr.mxu0 0.0
      %1464 = vmatpush1.msra.mxu0 0.0
      %1465 = vmatprep.subr.mxu0 0.0
      %1466 = vmatpush1.msra.mxu0 0.0
      %1467 = vmatprep.subr.mxu0 0.0
      %1468 = vmatpush1.msra.mxu0 0.0
      %1469 = vmatprep.subr.mxu0 0.0
      %1470 = vmatpush1.msra.mxu0 0.0
      %1471 = vmatprep.subr.mxu0 0.0
      %1472 = vmatpush1.msra.mxu0 0.0
      %1473 = vmatprep.subr.mxu0 0.0
      %1474 = vmatpush1.msra.mxu0 0.0
      %1475 = vmatprep.subr.mxu0 0.0
      %1476 = vmatpush1.msra.mxu0 0.0
      %1477 = vmatprep.subr.mxu0 0.0
      %1478 = vmatpush1.msra.mxu0 0.0
      %1479 = vmatprep.subr.mxu0 0.0
      %1480 = vmatpush1.msra.mxu0 0.0
      %1481 = vmatprep.subr.mxu0 0.0
      %1482 = vmatpush1.msra.mxu0 0.0
      %1483 = vmatprep.subr.mxu0 0.0
      %1484 = vmatpush1.msra.mxu0 0.0
      %1485 = vmatprep.subr.mxu0 0.0
      %1486 = vmatpush1.msra.mxu0 0.0
      %1487 = vmatprep.mubr.f32.mxu0 0.0
      %1488 = vmatmul.mubr.f32.gmra.mrb[0].mxu0 %v1421
      %v1489 = vpop.f32.mrb[0].mxu0
      %v1490 = vadd.f32 %v1417, %v1489
      %v1491 = vpop.f32.mrb[0].mxu0
      %1492 = vdwg.mxu0
      %v1493 = vadd.f32 %v1318, %v1490
      %v1494 = vsel %vm448, %v1493, 0.0
      %1495 = vadd.xlane.f32.xlu0 %v1494
      %v1496 = vpop.xlane.xlu0 %1495
      %v1497 = vmul.f32 %v1496, %v1292
      %v1498 = vsub.f32 %v1493, %v1497
      %v1499 = vmul.f32 %v1498, %v1498
      %v1500 = vsel %vm448, %v1499, 0.0
      %1501 = vadd.xlane.f32.xlu0 %v1500
      %v1502 = vpop.xlane.xlu0 %1501
      %v1503 = vmul.f32 %v1502, %v1292
      %v1504 = vadd.f32 %v1503, 1e-05
      %v1505 = vrsqrt.pop %v1504
      %v1506 = vmul.f32 %v1498, %v1505
      %v1507 = vld [vmem:[%s11] sm:$0x1]
      %v1509 = vlaneseq
      %v1510 = vshrl.u32 %v1509, 7
      %v1511 = vsub.s32 0, %v1510
      %v1512 = vrot.slane %v1507, %v1511
      %v1514 = vmul.f32 %v1506, %v1512
      %v1515 = vld [vmem:[%s12] sm:$0x1]
      %v1517 = vlaneseq
      %v1518 = vshrl.u32 %v1517, 7
      %v1519 = vsub.s32 0, %v1518
      %v1520 = vrot.slane %v1515, %v1519
      %v1522 = vadd.f32 %v1514, %v1520
      %1523 = vst.msk [vmem:[%s435] sm:$0xff] %vm448, %v1522
      %p1524 = scmp.lt.s32.totalorder %s24, 1
      %s1525 = scalar_select %p1524, %s24, 1
      %s1526 = smul.addr %s1525, 8
      %s1527 = scalar_lea.vmem %s13, %s1526
      // Predicated region
      $region73: #{stock_transformer_forward.5} parent=71 // pred_check
        %p1528 = pneg %p320
      $region74: #{stock_transformer_forward.5} parent=71 // pred_check_branch
        %1530 = sbr.rel (%p1528) target = $region76
      $region75: #{stock_transformer_forward.5} parent=71 // pred_region
        _
      $region76: #{stock_transformer_forward.5} parent=71 // pred_fallthru
        _
    $region72: #{stock_transformer_forward.5} parent=5 // pred_fallthru
      _
    %p1531 = scmp.le.s32.totalorder 2, %s19
    // Predicated region
    $region77: #{stock_transformer_forward.5} parent=5 // pred_check
      %p1532 = pneg %p1531
    $region78: #{stock_transformer_forward.5} parent=5 // pred_check_branch
      %1534 = sbr.rel (%p1532) target = $region80
    $region79: #{stock_transformer_forward.5} parent=5 // pred_region
      %s1535 = ssub.s32 %s19, 2
      // Predicated region
      $region81: #{stock_transformer_forward.5} parent=79 // pred_check
        %p1536 = pneg %p326
      $region82: #{stock_transformer_forward.5} parent=79 // pred_check_branch
        %1538 = sbr.rel (%p1536) target = $region84
      $region83: #{stock_transformer_forward.5} parent=79 // pred_region
        %p1539 = scmp.lt.s32.totalorder %s25, 1
        %s1540 = scalar_select %p1539, %s25, 1
        %s1541 = smul.addr %s1540, 8
        %s1542 = scalar_lea.vmem %s13, %s1541
      $region84: #{stock_transformer_forward.5} parent=79 // pred_fallthru
        _
    $region80: #{stock_transformer_forward.5} parent=5 // pred_fallthru
      _
  $region6: #{stock_transformer_forward.5} parent=0 // loop_footer
    %s23 = sadd.s32 1, %s19
  $region7: #{stock_transformer_forward.5} parent=0 // loop_footer_branch
    %18 = sbr.rel target = $region3
  $region8: #{stock_transformer_forward.5} parent=0 // loop_exit
    _

</llo_original>
